<compile_context>
chip_gen: v5e
topology: v5e:2x2
jax: 0.10.0
libtpu: 0.0.40
codegen_flags: <defaults>
</compile_context>

<pallas_src>
import functools
import math

import numpy as np
import jax
import jax.numpy as jnp
from jax.experimental import pallas as pl
from jax.experimental.pallas import tpu as pltpu


# ----------------------------- config ------------------------------------
class Config:
    HIDDEN_SIZE = 32
    DIM_T = 8
    dim_D_h = 4            # history feature dim (agent[0][:, :4])
    dim_D_i = 6            # interact agent feature dim (coords in [:3])
    NUM_HEADS = 4          # encoder heads
    DIM_FFN = 64           # encoder feed-forward
    NUM_BLOCKS = 2         # encoder blocks (all 'multi_axis', latent_query=False)
    GRAPH_HIDDEN_SIZE = 16
    GRAPH_HEADS = 2
    GRAPH_DIM_FFN = 32
    GRAPH_DEPTH = 1
    DROPOUT = 0.0          # eval mode -> dropout is identity
    num_freq_bands = 8


CFG = Config()

# Number of batch slices for the fused encoder grid.
#  * v5e / v6e (1 TensorCore): 1 (whole batch in one grid step) is strictly best.
#  * v7x (2 TensorCores): set to 2 so the "parallel" grid axis shards over both cores.
_ENC_BATCH_SPLITS = 1


# ----------------------------- small helpers --------------------------------
def _full_spec(shape):
    nd = len(shape)
    return pl.BlockSpec(shape, lambda *_, _n=nd: (0,) * _n)


def _ln(v, g, b, eps=1e-5):
    mu = jnp.mean(v, axis=-1, keepdims=True)
    var = jnp.mean(jnp.square(v - mu), axis=-1, keepdims=True)
    return (v - mu) * jax.lax.rsqrt(var + eps) * g + b


def _softmax_rows(s):
    s = s - jnp.max(s, axis=-1, keepdims=True)
    p = jnp.exp(s)
    return p * pl.reciprocal(jnp.sum(p, axis=-1, keepdims=True), approx=True)


# ----------------------------- Pallas kernels ------------------------------
def _encoder_kernel(road_ref, inter_ref, hist_ref, bias_ref,
                    ln1g_ref, ln1b_ref, wqkv_ref, bqkv_ref, wo_ref, bo_ref,
                    ln2g_ref, ln2b_ref, w1_ref, b1_ref, w2_ref, b2_ref,
                    fng_ref, fnb_ref,
                    o_ref, x_scr,
                    *, n_head, n_blocks, dim_t, s_road, s_inter):
    """Full Encoder: in-VMEM token assembly, n_blocks pre-norm transformer layers
    (ReLU FFN, eval/no-dropout) and the final LayerNorm, for one batch slice."""
    Ab, _, D = road_ref.shape
    s_total = s_road + s_inter + 1
    L = dim_t * s_total
    dh = D // n_head

    road = road_ref[...]                      # [Ab, S_r, D]   (read once, not T-duplicated)
    inter = inter_ref[...]                    # [Ab, S_i, T, D]
    hist = hist_ref[...]                      # [Ab, T, D]
    bias = bias_ref[...]                      # [Ab, 1, L]  additive key-padding bias

    # ---- token assembly: per t -> [road(S_r), interact_t(S_i), hist_t(1)] -------------
    for a in range(Ab):
        road_a = road[a]
        for t in range(dim_t):
            r0 = a * L + t * s_total
            x_scr[r0:r0 + s_road, :] = road_a
            x_scr[r0 + s_road:r0 + s_road + s_inter, :] = inter[a, :, t, :]
            x_scr[r0 + s_road + s_inter:r0 + s_total, :] = hist[a, t:t + 1, :]

    x = x_scr[...]                            # [Ab*L, D]  (M rows feed every matmul)

    for nb in range(n_blocks):                # norm_first=True blocks
        h = _ln(x, ln1g_ref[nb], ln1b_ref[nb])
        # fused QKV projection (1/sqrt(dh) folded into the Q weights at init time)
        qkv = jnp.dot(h, wqkv_ref[nb], preferred_element_type=jnp.float32) + bqkv_ref[nb]
        wo_nb = wo_ref[nb]                    # [D, D]; rows hd*dh:(hd+1)*dh = head hd proj
        attn_parts = []
        for a in range(Ab):                   # static (batch, head) loop of 2D MXU dots
            r0 = a * L
            bias_a = bias[a]                  # [1, L]
            acc = None
            for hd in range(n_head):
                q = qkv[r0:r0 + L, hd * dh:(hd + 1) * dh]
                k = qkv[r0:r0 + L, D + hd * dh:D + (hd + 1) * dh]
                v = qkv[r0:r0 + L, 2 * D + hd * dh:2 * D + (hd + 1) * dh]
                s = jax.lax.dot_general(q, k, (((1,), (1,)), ((), ())),
                                        preferred_element_type=jnp.float32) + bias_a
                p = _softmax_rows(s)
                pv = jnp.dot(p, v, preferred_element_type=jnp.float32)     # [L, dh]
                term = jnp.dot(pv, wo_nb[hd * dh:(hd + 1) * dh, :],
                               preferred_element_type=jnp.float32)         # [L, D]
                acc = term if acc is None else acc + term
            attn_parts.append(acc)
        attn = attn_parts[0] if Ab == 1 else jnp.concatenate(attn_parts, axis=0)
        x = x + attn + bo_ref[nb]
        h2 = _ln(x, ln2g_ref[nb], ln2b_ref[nb])
        ff = jnp.dot(
            jnp.maximum(jnp.dot(h2, w1_ref[nb], preferred_element_type=jnp.float32)
                        + b1_ref[nb], 0.0),
            w2_ref[nb], preferred_element_type=jnp.float32) + b2_ref[nb]
        x = x + ff

    x = _ln(x, fng_ref[...], fnb_ref[...])    # Encoder.norm (final LayerNorm)
    for a in range(Ab):
        o_ref[a] = x[a * L:(a + 1) * L, :]


def fused_encoder(road_emb, inter_emb, hist_emb, bias, p, cfg, batch_splits=1):
    """road_emb [A,S_r,D], inter_emb [A,S_i,T,D], hist_emb [A,T,D], bias [A,1,L]."""
    A, S_r, D = road_emb.shape
    S_i, T = inter_emb.shape[1], inter_emb.shape[2]
    L = T * (S_r + S_i + 1)
    t = p['tfm']
    NB = t['wqkv'].shape[0]
    FFN = t['w1'].shape[-1]
    G = batch_splits if (batch_splits >= 1 and A % batch_splits == 0) else 1
    Ab = A // G

    kernel = functools.partial(_encoder_kernel, n_head=cfg.NUM_HEADS, n_blocks=NB,
                               dim_t=T, s_road=S_r, s_inter=S_i)

    return pl.pallas_call(
        kernel,
        out_shape=jax.ShapeDtypeStruct((A, L, D), jnp.float32),
        grid=(G,),
        in_specs=[
            pl.BlockSpec((Ab, S_r, D), lambda g: (g, 0, 0)),
            pl.BlockSpec((Ab, S_i, T, D), lambda g: (g, 0, 0, 0)),
            pl.BlockSpec((Ab, T, D), lambda g: (g, 0, 0)),
            pl.BlockSpec((Ab, 1, L), lambda g: (g, 0, 0)),
            _full_spec((NB, 1, D)), _full_spec((NB, 1, D)),
            _full_spec((NB, D, 3 * D)), _full_spec((NB, 1, 3 * D)),
            _full_spec((NB, D, D)), _full_spec((NB, 1, D)),
            _full_spec((NB, 1, D)), _full_spec((NB, 1, D)),
            _full_spec((NB, D, FFN)), _full_spec((NB, 1, FFN)),
            _full_spec((NB, FFN, D)), _full_spec((NB, 1, D)),
            _full_spec((1, D)), _full_spec((1, D)),
        ],
        out_specs=pl.BlockSpec((Ab, L, D), lambda g: (g, 0, 0)),
        scratch_shapes=[pltpu.VMEM((Ab * L, D), jnp.float32)],
        compiler_params=pltpu.CompilerParams(dimension_semantics=("parallel",)),
    )(road_emb, inter_emb, hist_emb, bias,
      t['ln1_g'], t['ln1_b'], t['wqkv'], t['bqkv'], t['wo'], t['bo'],
      t['ln2_g'], t['ln2_b'], t['w1'], t['b1'], t['w2'], t['b2'],
      p['norm_g'], p['norm_b'])


def _road_kernel(x_ref, feat_ref, valid_ref,
                 ln1g_ref, ln1b_ref, wqkv_ref, bqkv_ref, wo_ref, bo_ref,
                 ln2g_ref, ln2b_ref, w1_ref, b1_ref, w2_ref, b2_ref,
                 pw_ref, pb_ref, fw1_ref, fb1_ref, fw2_ref, fb2_ref,
                 o_ref, attn_scr, pool_scr,
                 *, n_head, n_layers, n_poly, n_seg, add_pos):
    """Whole RoadGraph path for all polylines: post-norm transformer layer(s), max over
    segments, Projection (Linear+ReLU), Fourier positional add and padding zero-out."""
    GH = x_ref.shape[-1]
    dh = GH // n_head
    x = x_ref[...]                            # [P*V, GH]

    for nl in range(n_layers):                # norm_first=False (PyTorch default), no mask
        qkv = jnp.dot(x, wqkv_ref[nl], preferred_element_type=jnp.float32) + bqkv_ref[nl]
        wo_nl = wo_ref[nl]
        for p_i in range(n_poly):
            r0 = p_i * n_seg
            acc = None
            for hd in range(n_head):
                q = qkv[r0:r0 + n_seg, hd * dh:(hd + 1) * dh]
                k = qkv[r0:r0 + n_seg, GH + hd * dh:GH + (hd + 1) * dh]
                v = qkv[r0:r0 + n_seg, 2 * GH + hd * dh:2 * GH + (hd + 1) * dh]
                s = jax.lax.dot_general(q, k, (((1,), (1,)), ((), ())),
                                        preferred_element_type=jnp.float32)
                p = _softmax_rows(s)
                pv = jnp.dot(p, v, preferred_element_type=jnp.float32)
                term = jnp.dot(pv, wo_nl[hd * dh:(hd + 1) * dh, :],
                               preferred_element_type=jnp.float32)
                acc = term if acc is None else acc + term
            attn_scr[r0:r0 + n_seg, :] = acc
        x = _ln(x + attn_scr[...] + bo_ref[nl], ln1g_ref[nl], ln1b_ref[nl])
        ff = jnp.dot(
            jnp.maximum(jnp.dot(x, w1_ref[nl], preferred_element_type=jnp.float32)
                        + b1_ref[nl], 0.0),
            w2_ref[nl], preferred_element_type=jnp.float32) + b2_ref[nl]
        x = _ln(x + ff, ln2g_ref[nl], ln2b_ref[nl])

    for p_i in range(n_poly):                 # torch.max(x, dim=1)[0] per polyline
        pool_scr[p_i:p_i + 1, :] = jnp.max(x[p_i * n_seg:(p_i + 1) * n_seg, :],
                                           axis=0, keepdims=True)
    emb = jnp.maximum(
        jnp.dot(pool_scr[...], pw_ref[...], preferred_element_type=jnp.float32)
        + pb_ref[...], 0.0)                   # Projection (Linear + ReLU) -> [P, HID]
    if add_pos:
        pos = jnp.dot(
            jnp.maximum(jnp.dot(feat_ref[...], fw1_ref[...],
                                preferred_element_type=jnp.float32) + fb1_ref[...], 0.0),
            fw2_ref[...], preferred_element_type=jnp.float32) + fb2_ref[...]
        emb = emb + pos
    # merge_tensors zero-padding semantics for missing polylines
    o_ref[...] = emb * valid_ref[...]


def fused_roadgraph(x_flat, feat, valid, rp, pos_p, n_head, add_pos):
    PV, GH = x_flat.shape
    P = valid.shape[0]
    V = PV // P
    HID = rp['proj_w'].shape[1]
    t = rp['tfm']
    NL = t['wqkv'].shape[0]
    FFN = t['w1'].shape[-1]
    Kf = feat.shape[1]

    kernel = functools.partial(_road_kernel, n_head=n_head, n_layers=NL,
                               n_poly=P, n_seg=V, add_pos=add_pos)
    return pl.pallas_call(
        kernel,
        out_shape=jax.ShapeDtypeStruct((P, HID), jnp.float32),
        grid=(1,),
        in_specs=[_full_spec((PV, GH)), _full_spec((P, Kf)), _full_spec((P, 1)),
                  _full_spec((NL, 1, GH)), _full_spec((NL, 1, GH)),
                  _full_spec((NL, GH, 3 * GH)), _full_spec((NL, 1, 3 * GH)),
                  _full_spec((NL, GH, GH)), _full_spec((NL, 1, GH)),
                  _full_spec((NL, 1, GH)), _full_spec((NL, 1, GH)),
                  _full_spec((NL, GH, FFN)), _full_spec((NL, 1, FFN)),
                  _full_spec((NL, FFN, GH)), _full_spec((NL, 1, GH)),
                  _full_spec((GH, HID)), _full_spec((1, HID)),
                  _full_spec((Kf, HID)), _full_spec((1, HID)),
                  _full_spec((HID, HID)), _full_spec((1, HID))],
        out_specs=_full_spec((P, HID)),
        scratch_shapes=[pltpu.VMEM((PV, GH), jnp.float32),
                        pltpu.VMEM((P, GH), jnp.float32)],
    )(x_flat, feat, valid,
      t['ln1_g'], t['ln1_b'], t['wqkv'], t['bqkv'], t['wo'], t['bo'],
      t['ln2_g'], t['ln2_b'], t['w1'], t['b1'], t['w2'], t['b2'],
      rp['proj_w'], rp['proj_b'],
      pos_p['w1'], pos_p['b1'], pos_p['w2'], pos_p['b2'])


def _embed_kernel(x_ref, feat_ref, pw_ref, pb_ref, w1_ref, b1_ref, w2_ref, b2_ref, o_ref):
    """relu(x @ Wp + bp) + MLP2(fourier_feat) - one launch per modality."""
    proj = jnp.maximum(
        jnp.dot(x_ref[...], pw_ref[...], preferred_element_type=jnp.float32) + pb_ref[...],
        0.0)
    pos = jnp.dot(
        jnp.maximum(jnp.dot(feat_ref[...], w1_ref[...],
                            preferred_element_type=jnp.float32) + b1_ref[...], 0.0),
        w2_ref[...], preferred_element_type=jnp.float32) + b2_ref[...]
    o_ref[...] = proj + pos


def fused_embed(x2d, feat2d, pw, pb, fp):
    M, K = x2d.shape
    Kf = feat2d.shape[1]
    H = pw.shape[1]
    return pl.pallas_call(
        _embed_kernel,
        out_shape=jax.ShapeDtypeStruct((M, H), jnp.float32),
        grid=(1,),
        in_specs=[_full_spec((M, K)), _full_spec((M, Kf)),
                  _full_spec((K, H)), _full_spec((1, H)),
                  _full_spec((Kf, H)), _full_spec((1, H)),
                  _full_spec((H, H)), _full_spec((1, H))],
        out_specs=_full_spec((M, H)),
    )(x2d, feat2d, pw, pb, fp['w1'], fp['b1'], fp['w2'], fp['b2'])


# ----------------------------- helper functions (host glue) ------------------
def get_1D_padding_mask(lengths, max_length):
    mask = np.zeros((len(lengths), max_length), dtype=bool)
    for i, length in enumerate(lengths):
        mask[i, length:] = True
    return mask


def get_2D_padding_mask(lengths, max_length1, max_length2):
    mask = np.zeros((len(lengths), max_length1, max_length2), dtype=bool)
    for i, len_list in enumerate(lengths):
        mask[i, len(len_list):, :] = True
        for j, length2 in enumerate(len_list):
            mask[i, j, length2:] = True
    return mask


def fourier_features(x, freqs):
    # TODO(synk): FourierEmbedding is not defined in the reference source; this is a
    # synthetic sinusoidal-feature + 2-layer MLP variant.  The cos/sin feature build
    # (tiny, elementwise) stays in plain JAX; the MLP + projection + add run in Pallas.
    ang = x[..., None] * freqs * (2.0 * jnp.pi)
    feat = jnp.concatenate([jnp.cos(ang), jnp.sin(ang), x[..., None]], axis=-1)
    return feat.reshape(*x.shape[:-1], -1)


# ----------------------------- model pieces ---------------------------------
def forward_road_embedding(matrix, params, cfg):
    """All polylines of all samples padded once and processed by ONE pallas_call."""
    A = len(matrix)
    lengths = [int(m.shape[0]) for m in matrix]
    S_max = max(lengths)
    V = int(matrix[0].shape[1])
    GH = int(matrix[0].shape[2])

    padded = np.zeros((A, S_max, V, GH), np.float32)          # host-side padding
    for i, m in enumerate(matrix):
        padded[i, :m.shape[0]] = np.asarray(m, np.float32)

    P = A * S_max
    x_flat = jnp.asarray(padded.reshape(P * V, GH))
    pad = get_1D_padding_mask(lengths, S_max)                 # [A, S_max] bool
    valid = jnp.asarray((~pad).reshape(P, 1).astype(np.float32))

    add_pos = (GH >= 2 and S_max > 0)
    centers = padded[..., -2:].mean(axis=2).reshape(P, 2)     # per-polyline center
    feat = fourier_features(jnp.asarray(centers), params['pos_emb_road']['freqs'])

    emb = fused_roadgraph(x_flat, feat, valid, params['roadgraph'],
                          params['pos_emb_road'], cfg.GRAPH_HEADS, add_pos)
    emb = emb.reshape(A, S_max, cfg.HIDDEN_SIZE)              # NOT T-duplicated here
    return emb, pad


def forward_interact_embedding(agents, params, cfg):
    A = len(agents)
    S_max = max(len(agent) for agent in agents)
    T, Di = cfg.DIM_T, cfg.dim_D_i

    length_list = []
    padded = np.zeros((A, S_max, T, Di), np.float32)          # host-side padding
    for i, agent in enumerate(agents):
        lens = []
        for j, a in enumerate(agent):
            a = np.asarray(a, np.float32)
            Lr = min(int(a.shape[0]), T)
            padded[i, j, :Lr] = a[:Lr]
            lens.append(int(a.shape[0]))
        length_list.append(lens)

    x2d = jnp.asarray(padded.reshape(A * S_max * T, Di))
    feat = fourier_features(jnp.asarray(padded[..., :3].reshape(A * S_max * T, 3)),
                            params['pos_emb_interact']['freqs'])
    emb = fused_embed(x2d, feat, params['proj2_w'], params['proj2_b'],
                      params['pos_emb_interact'])
    emb = emb.reshape(A, S_max, T, cfg.HIDDEN_SIZE)           # kept in [A,S,T,D]; no transpose
    pad = get_2D_padding_mask(length_list, S_max, T)          # [A, S, T]
    return emb, pad


def forward_history_embedding(agents, params, cfg):
    A = len(agents)
    # TODO(synk): like the reference, this assumes every agent[0] has exactly DIM_T rows.
    hist = np.stack([np.asarray(agent[0], np.float32)[:, :4] for agent in agents])
    T = hist.shape[1]
    x2d = jnp.asarray(hist.reshape(A * T, 4))
    feat = fourier_features(jnp.asarray(hist[..., :3].reshape(A * T, 3)),
                            params['pos_emb']['freqs'])
    emb = fused_embed(x2d, feat, params['proj1_w'], params['proj1_b'], params['pos_emb'])
    return emb.reshape(A, T, cfg.HIDDEN_SIZE)


def early_fusion_forward(agents, matrix, params, cfg, batch_splits=_ENC_BATCH_SPLITS):
    road_emb, road_pad = forward_road_embedding(matrix, params, cfg)       # [A,S_r,D],[A,S_r]
    inter_emb, inter_pad = forward_interact_embedding(agents, params, cfg) # [A,S_i,T,D],[A,S_i,T]
    hist_emb = forward_history_embedding(agents, params, cfg)              # [A,T,D]

    A, S_r, _ = road_emb.shape
    S_i = inter_emb.shape[1]
    T = hist_emb.shape[1]
    S_total = S_r + S_i + 1
    L = T * S_total

    # token-level padding mask; layout matches the in-kernel token assembly:
    # per t -> [road(S_r), interact_t(S_i), hist_t(1)]
    road_m = np.broadcast_to(road_pad[:, None, :], (A, T, S_r))
    inter_m = np.transpose(inter_pad, (0, 2, 1))
    hist_m = np.zeros((A, T, 1), dtype=bool)
    padding_mask = np.concatenate([road_m, inter_m, hist_m], axis=2)       # [A, T, S_total]
    memory_mask = jnp.asarray(padding_mask.reshape(A, L))

    m = padding_mask.reshape(A, L).copy()
    all_true = m.all(axis=1)
    m[all_true] = False                                                    # reference behavior
    bias = jnp.asarray(np.where(m, -100000.0, 0.0).astype(np.float32))[:, None, :]

    memory = fused_encoder(road_emb, inter_emb, hist_emb, bias,
                           params['encoder'], cfg, batch_splits)
    return memory, memory_mask
    # TODO(synk): the reference wraps this in try/except with a zero fallback; omitted.


# ----------------------------- parameter init -------------------------------
def _dense_init(key, din, dout):
    w = (jax.random.normal(key, (din, dout), jnp.float32) / np.sqrt(din)).astype(jnp.float32)
    b = jnp.zeros((1, dout), jnp.float32)
    return w, b


def _init_tfm_stack(key, n_layers, d, dff, n_head):
    """nn.TransformerEncoderLayer params for n_layers layers, stacked on a leading dim.
    QKV fused into one lane-dense weight; attention scale folded into Q."""
    per = []
    for k in jax.random.split(key, n_layers):
        ks = jax.random.split(k, 6)
        wq, bq = _dense_init(ks[0], d, d)
        wk, bk = _dense_init(ks[1], d, d)
        wv, bv = _dense_init(ks[2], d, d)
        wo, bo = _dense_init(ks[3], d, d)
        w1, b1 = _dense_init(ks[4], d, dff)
        w2, b2 = _dense_init(ks[5], dff, d)
        scale = 1.0 / math.sqrt(d // n_head)
        per.append(dict(
            wqkv=jnp.concatenate([wq * scale, wk, wv], axis=1),
            bqkv=jnp.concatenate([bq * scale, bk, bv], axis=1),
            wo=wo, bo=bo, w1=w1, b1=b1, w2=w2, b2=b2,
            ln1_g=jnp.ones((1, d), jnp.float32), ln1_b=jnp.zeros((1, d), jnp.float32),
            ln2_g=jnp.ones((1, d), jnp.float32), ln2_b=jnp.zeros((1, d), jnp.float32)))
    return {name: jnp.stack([p[name] for p in per]) for name in per[0]}


def _init_fourier(key, input_dim, hidden, nfreq):
    ks = jax.random.split(key, 3)
    freqs = jax.random.normal(ks[0], (input_dim, nfreq), jnp.float32)
    w1, b1 = _dense_init(ks[1], input_dim * (2 * nfreq + 1), hidden)
    w2, b2 = _dense_init(ks[2], hidden, hidden)
    return dict(freqs=freqs, w1=w1, b1=b1, w2=w2, b2=b2)


def init_early_fusion(key, cfg):
    ks = jax.random.split(key, 8)
    roadgraph = dict(
        tfm=_init_tfm_stack(ks[0], cfg.GRAPH_DEPTH, cfg.GRAPH_HIDDEN_SIZE,
                            cfg.GRAPH_DIM_FFN, cfg.GRAPH_HEADS))
    roadgraph['proj_w'], roadgraph['proj_b'] = _dense_init(
        ks[1], cfg.GRAPH_HIDDEN_SIZE, cfg.HIDDEN_SIZE)
    encoder = dict(
        tfm=_init_tfm_stack(ks[2], cfg.NUM_BLOCKS, cfg.HIDDEN_SIZE, cfg.DIM_FFN,
                            cfg.NUM_HEADS),
        norm_g=jnp.ones((1, cfg.HIDDEN_SIZE), jnp.float32),
        norm_b=jnp.zeros((1, cfg.HIDDEN_SIZE), jnp.float32))
    p1w, p1b = _dense_init(ks[3], cfg.dim_D_h, cfg.HIDDEN_SIZE)
    p2w, p2b = _dense_init(ks[4], cfg.dim_D_i, cfg.HIDDEN_SIZE)
    return dict(
        roadgraph=roadgraph, encoder=encoder,
        proj1_w=p1w, proj1_b=p1b, proj2_w=p2w, proj2_b=p2b,
        pos_emb=_init_fourier(ks[5], 3, cfg.HIDDEN_SIZE, cfg.num_freq_bands),
        pos_emb_interact=_init_fourier(ks[6], 3, cfg.HIDDEN_SIZE, cfg.num_freq_bands),
        pos_emb_road=_init_fourier(ks[7], 2, cfg.HIDDEN_SIZE, cfg.num_freq_bands))


# ----------------------------- main ------------------------------------------
if __name__ == "__main__":
    key = jax.random.PRNGKey(0)
    k_params, k_data = jax.random.split(key)
    params = init_early_fusion(k_params, CFG)

    dks = jax.random.split(k_data, 7)
    T = CFG.DIM_T
    # agents: list (batch) of lists of per-agent trajectories [T_i, dim_D_i]
    agents = [
        [np.asarray(jax.random.normal(dks[0], (T, CFG.dim_D_i)), np.float32),
         np.asarray(jax.random.normal(dks[1], (5, CFG.dim_D_i)), np.float32),
         np.asarray(jax.random.normal(dks[2], (3, CFG.dim_D_i)), np.float32)],
        [np.asarray(jax.random.normal(dks[3], (T, CFG.dim_D_i)), np.float32),
         np.asarray(jax.random.normal(dks[4], (6, CFG.dim_D_i)), np.float32)],
    ]
    # matrix: list (batch) of road polylines [S_r, V, GRAPH_HIDDEN_SIZE]
    matrix = [
        np.asarray(jax.random.normal(dks[5], (3, 5, CFG.GRAPH_HIDDEN_SIZE)), np.float32),
        np.asarray(jax.random.normal(dks[6], (2, 5, CFG.GRAPH_HIDDEN_SIZE)), np.float32),
    ]

    memory, memory_mask = early_fusion_forward(agents, matrix, params, CFG)
    jax.block_until_ready(memory)
    jax.block_until_ready(memory_mask)

    S_total = 3 + 3 + 1   # road + interact + history tokens
    assert memory.shape == (2, T * S_total, CFG.HIDDEN_SIZE)
    assert memory_mask.shape == (2, T * S_total)
    assert bool(jnp.all(jnp.isfinite(memory)))
    print("KERNEL_OK")
</pallas_src>

<mosaic_0001>
module attributes {stable_mosaic.version = 11 : i64} {
  func.func @_road_kernel(%arg0: i32, %arg1: memref<30x16xf32, #tpu.memory_space<vmem>>, %arg2: memref<6x34xf32, #tpu.memory_space<vmem>>, %arg3: memref<6x1xf32, #tpu.memory_space<vmem>>, %arg4: memref<1x1x16xf32, #tpu.memory_space<vmem>>, %arg5: memref<1x1x16xf32, #tpu.memory_space<vmem>>, %arg6: memref<1x16x48xf32, #tpu.memory_space<vmem>>, %arg7: memref<1x1x48xf32, #tpu.memory_space<vmem>>, %arg8: memref<1x16x16xf32, #tpu.memory_space<vmem>>, %arg9: memref<1x1x16xf32, #tpu.memory_space<vmem>>, %arg10: memref<1x1x16xf32, #tpu.memory_space<vmem>>, %arg11: memref<1x1x16xf32, #tpu.memory_space<vmem>>, %arg12: memref<1x16x32xf32, #tpu.memory_space<vmem>>, %arg13: memref<1x1x32xf32, #tpu.memory_space<vmem>>, %arg14: memref<1x32x16xf32, #tpu.memory_space<vmem>>, %arg15: memref<1x1x16xf32, #tpu.memory_space<vmem>>, %arg16: memref<16x32xf32, #tpu.memory_space<vmem>>, %arg17: memref<1x32xf32, #tpu.memory_space<vmem>>, %arg18: memref<34x32xf32, #tpu.memory_space<vmem>>, %arg19: memref<1x32xf32, #tpu.memory_space<vmem>>, %arg20: memref<32x32xf32, #tpu.memory_space<vmem>>, %arg21: memref<1x32xf32, #tpu.memory_space<vmem>>, %arg22: memref<6x32xf32, #tpu.memory_space<vmem>>, %arg23: memref<30x16xf32, #tpu.memory_space<vmem>>, %arg24: memref<6x16xf32, #tpu.memory_space<vmem>>) attributes {dimension_semantics = [#tpu.dimension_semantics<arbitrary>], iteration_bounds = array<i64: 1>, scalar_prefetch = 0 : i64, scratch_operands = 2 : i64, tpu.core_type = #tpu.core_type<tc>, window_params = [{pipeline_mode = #tpu.pipeline_mode<synchronous>, transform_indices = @transform_0, window_bounds = array<i64: 30, 16>}, {pipeline_mode = #tpu.pipeline_mode<synchronous>, transform_indices = @transform_1, window_bounds = array<i64: 6, 34>}, {pipeline_mode = #tpu.pipeline_mode<synchronous>, transform_indices = @transform_2, window_bounds = array<i64: 6, 1>}, {pipeline_mode = #tpu.pipeline_mode<synchronous>, transform_indices = @transform_3, window_bounds = array<i64: 1, 1, 16>}, {pipeline_mode = #tpu.pipeline_mode<synchronous>, transform_indices = @transform_4, window_bounds = array<i64: 1, 1, 16>}, {pipeline_mode = #tpu.pipeline_mode<synchronous>, transform_indices = @transform_5, window_bounds = array<i64: 1, 16, 48>}, {pipeline_mode = #tpu.pipeline_mode<synchronous>, transform_indices = @transform_6, window_bounds = array<i64: 1, 1, 48>}, {pipeline_mode = #tpu.pipeline_mode<synchronous>, transform_indices = @transform_7, window_bounds = array<i64: 1, 16, 16>}, {pipeline_mode = #tpu.pipeline_mode<synchronous>, transform_indices = @transform_8, window_bounds = array<i64: 1, 1, 16>}, {pipeline_mode = #tpu.pipeline_mode<synchronous>, transform_indices = @transform_9, window_bounds = array<i64: 1, 1, 16>}, {pipeline_mode = #tpu.pipeline_mode<synchronous>, transform_indices = @transform_10, window_bounds = array<i64: 1, 1, 16>}, {pipeline_mode = #tpu.pipeline_mode<synchronous>, transform_indices = @transform_11, window_bounds = array<i64: 1, 16, 32>}, {pipeline_mode = #tpu.pipeline_mode<synchronous>, transform_indices = @transform_12, window_bounds = array<i64: 1, 1, 32>}, {pipeline_mode = #tpu.pipeline_mode<synchronous>, transform_indices = @transform_13, window_bounds = array<i64: 1, 32, 16>}, {pipeline_mode = #tpu.pipeline_mode<synchronous>, transform_indices = @transform_14, window_bounds = array<i64: 1, 1, 16>}, {pipeline_mode = #tpu.pipeline_mode<synchronous>, transform_indices = @transform_15, window_bounds = array<i64: 16, 32>}, {pipeline_mode = #tpu.pipeline_mode<synchronous>, transform_indices = @transform_16, window_bounds = array<i64: 1, 32>}, {pipeline_mode = #tpu.pipeline_mode<synchronous>, transform_indices = @transform_17, window_bounds = array<i64: 34, 32>}, {pipeline_mode = #tpu.pipeline_mode<synchronous>, transform_indices = @transform_18, window_bounds = array<i64: 1, 32>}, {pipeline_mode = #tpu.pipeline_mode<synchronous>, transform_indices = @transform_19, window_bounds = array<i64: 32, 32>}, {pipeline_mode = #tpu.pipeline_mode<synchronous>, transform_indices = @transform_20, window_bounds = array<i64: 1, 32>}, {pipeline_mode = #tpu.pipeline_mode<synchronous>, transform_indices = @transform_21, window_bounds = array<i64: 6, 32>}]} {
    %c0 = arith.constant 0 : index
    %c0_0 = arith.constant 0 : index
    %0 = vector.load %arg1[%c0, %c0_0] : memref<30x16xf32, #tpu.memory_space<vmem>>, vector<30x16xf32>
    %c0_1 = arith.constant 0 : index
    %c0_2 = arith.constant 0 : index
    %c0_3 = arith.constant 0 : index
    %1 = vector.load %arg6[%c0_1, %c0_2, %c0_3] : memref<1x16x48xf32, #tpu.memory_space<vmem>>, vector<1x16x48xf32>
    %2 = vector.shape_cast %1 : vector<1x16x48xf32> to vector<16x48xf32>
    %cst = arith.constant dense<0.000000e+00> : vector<30x48xf32>
    %3 = tpu.matmul %0, %2, %cst {dimension_numbers = #tpu.dot_dimension_numbers<[1], [0], [0], [1], [0, 0, 1, 1], [], []>} : vector<30x16xf32>, vector<16x48xf32>, vector<30x48xf32> -> vector<30x48xf32>
    %c0_4 = arith.constant 0 : index
    %c0_5 = arith.constant 0 : index
    %c0_6 = arith.constant 0 : index
    %4 = vector.load %arg7[%c0_4, %c0_5, %c0_6] : memref<1x1x48xf32, #tpu.memory_space<vmem>>, vector<1x1x48xf32>
    %5 = vector.shape_cast %4 : vector<1x1x48xf32> to vector<1x48xf32>
    %6 = vector.broadcast %5 : vector<1x48xf32> to vector<30x48xf32>
    %7 = arith.addf %3, %6 : vector<30x48xf32>
    %c0_7 = arith.constant 0 : index
    %c0_8 = arith.constant 0 : index
    %c0_9 = arith.constant 0 : index
    %8 = vector.load %arg8[%c0_7, %c0_8, %c0_9] : memref<1x16x16xf32, #tpu.memory_space<vmem>>, vector<1x16x16xf32>
    %9 = vector.shape_cast %8 : vector<1x16x16xf32> to vector<16x16xf32>
    %10 = vector.extract_strided_slice %7 {offsets = [0, 0], sizes = [5, 8], strides = [1, 1]} : vector<30x48xf32> to vector<5x8xf32>
    %11 = vector.extract_strided_slice %7 {offsets = [0, 16], sizes = [5, 8], strides = [1, 1]} : vector<30x48xf32> to vector<5x8xf32>
    %12 = vector.extract_strided_slice %7 {offsets = [0, 32], sizes = [5, 8], strides = [1, 1]} : vector<30x48xf32> to vector<5x8xf32>
    %cst_10 = arith.constant dense<0.000000e+00> : vector<5x5xf32>
    %13 = tpu.matmul %10, %11, %cst_10 {dimension_numbers = #tpu.dot_dimension_numbers<[1], [1], [0], [0], [0, 0, 1, 0], [], []>} : vector<5x8xf32>, vector<5x8xf32>, vector<5x5xf32> -> vector<5x5xf32>
    %cst_11 = arith.constant dense<0xFF800000> : vector<5xf32>
    %14 = vector.multi_reduction <maximumf>, %13, %cst_11 [1] : vector<5x5xf32> to vector<5xf32>
    %15 = vector.shape_cast %14 : vector<5xf32> to vector<5x1xf32>
    %16 = vector.broadcast %15 : vector<5x1xf32> to vector<5x5xf32>
    %17 = arith.subf %13, %16 : vector<5x5xf32>
    %18 = math.exp %17 : vector<5x5xf32>
    %cst_12 = arith.constant dense<0.000000e+00> : vector<5xf32>
    %19 = vector.multi_reduction <add>, %18, %cst_12 [1] : vector<5x5xf32> to vector<5xf32>
    %20 = vector.shape_cast %19 : vector<5xf32> to vector<5x1xf32>
    %21 = tpu.reciprocal %20 {approx = true} : vector<5x1xf32> -> vector<5x1xf32>
    %22 = vector.broadcast %21 : vector<5x1xf32> to vector<5x5xf32>
    %23 = arith.mulf %18, %22 : vector<5x5xf32>
    %cst_13 = arith.constant dense<0.000000e+00> : vector<5x8xf32>
    %24 = tpu.matmul %23, %12, %cst_13 {dimension_numbers = #tpu.dot_dimension_numbers<[1], [0], [0], [1], [0, 0, 1, 1], [], []>} : vector<5x5xf32>, vector<5x8xf32>, vector<5x8xf32> -> vector<5x8xf32>
    %25 = vector.extract_strided_slice %9 {offsets = [0, 0], sizes = [8, 16], strides = [1, 1]} : vector<16x16xf32> to vector<8x16xf32>
    %cst_14 = arith.constant dense<0.000000e+00> : vector<5x16xf32>
    %26 = tpu.matmul %24, %25, %cst_14 {dimension_numbers = #tpu.dot_dimension_numbers<[1], [0], [0], [1], [0, 0, 1, 1], [], []>} : vector<5x8xf32>, vector<8x16xf32>, vector<5x16xf32> -> vector<5x16xf32>
    %27 = vector.extract_strided_slice %7 {offsets = [0, 8], sizes = [5, 8], strides = [1, 1]} : vector<30x48xf32> to vector<5x8xf32>
    %28 = vector.extract_strided_slice %7 {offsets = [0, 24], sizes = [5, 8], strides = [1, 1]} : vector<30x48xf32> to vector<5x8xf32>
    %29 = vector.extract_strided_slice %7 {offsets = [0, 40], sizes = [5, 8], strides = [1, 1]} : vector<30x48xf32> to vector<5x8xf32>
    %cst_15 = arith.constant dense<0.000000e+00> : vector<5x5xf32>
    %30 = tpu.matmul %27, %28, %cst_15 {dimension_numbers = #tpu.dot_dimension_numbers<[1], [1], [0], [0], [0, 0, 1, 0], [], []>} : vector<5x8xf32>, vector<5x8xf32>, vector<5x5xf32> -> vector<5x5xf32>
    %cst_16 = arith.constant dense<0xFF800000> : vector<5xf32>
    %31 = vector.multi_reduction <maximumf>, %30, %cst_16 [1] : vector<5x5xf32> to vector<5xf32>
    %32 = vector.shape_cast %31 : vector<5xf32> to vector<5x1xf32>
    %33 = vector.broadcast %32 : vector<5x1xf32> to vector<5x5xf32>
    %34 = arith.subf %30, %33 : vector<5x5xf32>
    %35 = math.exp %34 : vector<5x5xf32>
    %cst_17 = arith.constant dense<0.000000e+00> : vector<5xf32>
    %36 = vector.multi_reduction <add>, %35, %cst_17 [1] : vector<5x5xf32> to vector<5xf32>
    %37 = vector.shape_cast %36 : vector<5xf32> to vector<5x1xf32>
    %38 = tpu.reciprocal %37 {approx = true} : vector<5x1xf32> -> vector<5x1xf32>
    %39 = vector.broadcast %38 : vector<5x1xf32> to vector<5x5xf32>
    %40 = arith.mulf %35, %39 : vector<5x5xf32>
    %cst_18 = arith.constant dense<0.000000e+00> : vector<5x8xf32>
    %41 = tpu.matmul %40, %29, %cst_18 {dimension_numbers = #tpu.dot_dimension_numbers<[1], [0], [0], [1], [0, 0, 1, 1], [], []>} : vector<5x5xf32>, vector<5x8xf32>, vector<5x8xf32> -> vector<5x8xf32>
    %42 = vector.extract_strided_slice %9 {offsets = [8, 0], sizes = [8, 16], strides = [1, 1]} : vector<16x16xf32> to vector<8x16xf32>
    %cst_19 = arith.constant dense<0.000000e+00> : vector<5x16xf32>
    %43 = tpu.matmul %41, %42, %cst_19 {dimension_numbers = #tpu.dot_dimension_numbers<[1], [0], [0], [1], [0, 0, 1, 1], [], []>} : vector<5x8xf32>, vector<8x16xf32>, vector<5x16xf32> -> vector<5x16xf32>
    %44 = arith.addf %26, %43 : vector<5x16xf32>
    %c0_20 = arith.constant 0 : index
    %c0_21 = arith.constant 0 : index
    %45 = vector.load %arg23[%c0_20, %c0_21] : memref<30x16xf32, #tpu.memory_space<vmem>>, vector<5x16xf32>
    tpu.vector_store %arg23[%c0_20, %c0_21], %44 {strides = array<i32>} : memref<30x16xf32, #tpu.memory_space<vmem>>, vector<5x16xf32>,
    %46 = vector.extract_strided_slice %7 {offsets = [5, 0], sizes = [5, 8], strides = [1, 1]} : vector<30x48xf32> to vector<5x8xf32>
    %47 = vector.extract_strided_slice %7 {offsets = [5, 16], sizes = [5, 8], strides = [1, 1]} : vector<30x48xf32> to vector<5x8xf32>
    %48 = vector.extract_strided_slice %7 {offsets = [5, 32], sizes = [5, 8], strides = [1, 1]} : vector<30x48xf32> to vector<5x8xf32>
    %cst_22 = arith.constant dense<0.000000e+00> : vector<5x5xf32>
    %49 = tpu.matmul %46, %47, %cst_22 {dimension_numbers = #tpu.dot_dimension_numbers<[1], [1], [0], [0], [0, 0, 1, 0], [], []>} : vector<5x8xf32>, vector<5x8xf32>, vector<5x5xf32> -> vector<5x5xf32>
    %cst_23 = arith.constant dense<0xFF800000> : vector<5xf32>
    %50 = vector.multi_reduction <maximumf>, %49, %cst_23 [1] : vector<5x5xf32> to vector<5xf32>
    %51 = vector.shape_cast %50 : vector<5xf32> to vector<5x1xf32>
    %52 = vector.broadcast %51 : vector<5x1xf32> to vector<5x5xf32>
    %53 = arith.subf %49, %52 : vector<5x5xf32>
    %54 = math.exp %53 : vector<5x5xf32>
    %cst_24 = arith.constant dense<0.000000e+00> : vector<5xf32>
    %55 = vector.multi_reduction <add>, %54, %cst_24 [1] : vector<5x5xf32> to vector<5xf32>
    %56 = vector.shape_cast %55 : vector<5xf32> to vector<5x1xf32>
    %57 = tpu.reciprocal %56 {approx = true} : vector<5x1xf32> -> vector<5x1xf32>
    %58 = vector.broadcast %57 : vector<5x1xf32> to vector<5x5xf32>
    %59 = arith.mulf %54, %58 : vector<5x5xf32>
    %cst_25 = arith.constant dense<0.000000e+00> : vector<5x8xf32>
    %60 = tpu.matmul %59, %48, %cst_25 {dimension_numbers = #tpu.dot_dimension_numbers<[1], [0], [0], [1], [0, 0, 1, 1], [], []>} : vector<5x5xf32>, vector<5x8xf32>, vector<5x8xf32> -> vector<5x8xf32>
    %61 = vector.extract_strided_slice %9 {offsets = [0, 0], sizes = [8, 16], strides = [1, 1]} : vector<16x16xf32> to vector<8x16xf32>
    %cst_26 = arith.constant dense<0.000000e+00> : vector<5x16xf32>
    %62 = tpu.matmul %60, %61, %cst_26 {dimension_numbers = #tpu.dot_dimension_numbers<[1], [0], [0], [1], [0, 0, 1, 1], [], []>} : vector<5x8xf32>, vector<8x16xf32>, vector<5x16xf32> -> vector<5x16xf32>
    %63 = vector.extract_strided_slice %7 {offsets = [5, 8], sizes = [5, 8], strides = [1, 1]} : vector<30x48xf32> to vector<5x8xf32>
    %64 = vector.extract_strided_slice %7 {offsets = [5, 24], sizes = [5, 8], strides = [1, 1]} : vector<30x48xf32> to vector<5x8xf32>
    %65 = vector.extract_strided_slice %7 {offsets = [5, 40], sizes = [5, 8], strides = [1, 1]} : vector<30x48xf32> to vector<5x8xf32>
    %cst_27 = arith.constant dense<0.000000e+00> : vector<5x5xf32>
    %66 = tpu.matmul %63, %64, %cst_27 {dimension_numbers = #tpu.dot_dimension_numbers<[1], [1], [0], [0], [0, 0, 1, 0], [], []>} : vector<5x8xf32>, vector<5x8xf32>, vector<5x5xf32> -> vector<5x5xf32>
    %cst_28 = arith.constant dense<0xFF800000> : vector<5xf32>
    %67 = vector.multi_reduction <maximumf>, %66, %cst_28 [1] : vector<5x5xf32> to vector<5xf32>
    %68 = vector.shape_cast %67 : vector<5xf32> to vector<5x1xf32>
    %69 = vector.broadcast %68 : vector<5x1xf32> to vector<5x5xf32>
    %70 = arith.subf %66, %69 : vector<5x5xf32>
    %71 = math.exp %70 : vector<5x5xf32>
    %cst_29 = arith.constant dense<0.000000e+00> : vector<5xf32>
    %72 = vector.multi_reduction <add>, %71, %cst_29 [1] : vector<5x5xf32> to vector<5xf32>
    %73 = vector.shape_cast %72 : vector<5xf32> to vector<5x1xf32>
    %74 = tpu.reciprocal %73 {approx = true} : vector<5x1xf32> -> vector<5x1xf32>
    %75 = vector.broadcast %74 : vector<5x1xf32> to vector<5x5xf32>
    %76 = arith.mulf %71, %75 : vector<5x5xf32>
    %cst_30 = arith.constant dense<0.000000e+00> : vector<5x8xf32>
    %77 = tpu.matmul %76, %65, %cst_30 {dimension_numbers = #tpu.dot_dimension_numbers<[1], [0], [0], [1], [0, 0, 1, 1], [], []>} : vector<5x5xf32>, vector<5x8xf32>, vector<5x8xf32> -> vector<5x8xf32>
    %78 = vector.extract_strided_slice %9 {offsets = [8, 0], sizes = [8, 16], strides = [1, 1]} : vector<16x16xf32> to vector<8x16xf32>
    %cst_31 = arith.constant dense<0.000000e+00> : vector<5x16xf32>
    %79 = tpu.matmul %77, %78, %cst_31 {dimension_numbers = #tpu.dot_dimension_numbers<[1], [0], [0], [1], [0, 0, 1, 1], [], []>} : vector<5x8xf32>, vector<8x16xf32>, vector<5x16xf32> -> vector<5x16xf32>
    %80 = arith.addf %62, %79 : vector<5x16xf32>
    %c5 = arith.constant 5 : index
    %c0_32 = arith.constant 0 : index
    %81 = vector.load %arg23[%c5, %c0_32] : memref<30x16xf32, #tpu.memory_space<vmem>>, vector<5x16xf32>
    tpu.vector_store %arg23[%c5, %c0_32], %80 {strides = array<i32>} : memref<30x16xf32, #tpu.memory_space<vmem>>, vector<5x16xf32>,
    %82 = vector.extract_strided_slice %7 {offsets = [10, 0], sizes = [5, 8], strides = [1, 1]} : vector<30x48xf32> to vector<5x8xf32>
    %83 = vector.extract_strided_slice %7 {offsets = [10, 16], sizes = [5, 8], strides = [1, 1]} : vector<30x48xf32> to vector<5x8xf32>
    %84 = vector.extract_strided_slice %7 {offsets = [10, 32], sizes = [5, 8], strides = [1, 1]} : vector<30x48xf32> to vector<5x8xf32>
    %cst_33 = arith.constant dense<0.000000e+00> : vector<5x5xf32>
    %85 = tpu.matmul %82, %83, %cst_33 {dimension_numbers = #tpu.dot_dimension_numbers<[1], [1], [0], [0], [0, 0, 1, 0], [], []>} : vector<5x8xf32>, vector<5x8xf32>, vector<5x5xf32> -> vector<5x5xf32>
    %cst_34 = arith.constant dense<0xFF800000> : vector<5xf32>
    %86 = vector.multi_reduction <maximumf>, %85, %cst_34 [1] : vector<5x5xf32> to vector<5xf32>
    %87 = vector.shape_cast %86 : vector<5xf32> to vector<5x1xf32>
    %88 = vector.broadcast %87 : vector<5x1xf32> to vector<5x5xf32>
    %89 = arith.subf %85, %88 : vector<5x5xf32>
    %90 = math.exp %89 : vector<5x5xf32>
    %cst_35 = arith.constant dense<0.000000e+00> : vector<5xf32>
    %91 = vector.multi_reduction <add>, %90, %cst_35 [1] : vector<5x5xf32> to vector<5xf32>
    %92 = vector.shape_cast %91 : vector<5xf32> to vector<5x1xf32>
    %93 = tpu.reciprocal %92 {approx = true} : vector<5x1xf32> -> vector<5x1xf32>
    %94 = vector.broadcast %93 : vector<5x1xf32> to vector<5x5xf32>
    %95 = arith.mulf %90, %94 : vector<5x5xf32>
    %cst_36 = arith.constant dense<0.000000e+00> : vector<5x8xf32>
    %96 = tpu.matmul %95, %84, %cst_36 {dimension_numbers = #tpu.dot_dimension_numbers<[1], [0], [0], [1], [0, 0, 1, 1], [], []>} : vector<5x5xf32>, vector<5x8xf32>, vector<5x8xf32> -> vector<5x8xf32>
    %97 = vector.extract_strided_slice %9 {offsets = [0, 0], sizes = [8, 16], strides = [1, 1]} : vector<16x16xf32> to vector<8x16xf32>
    %cst_37 = arith.constant dense<0.000000e+00> : vector<5x16xf32>
    %98 = tpu.matmul %96, %97, %cst_37 {dimension_numbers = #tpu.dot_dimension_numbers<[1], [0], [0], [1], [0, 0, 1, 1], [], []>} : vector<5x8xf32>, vector<8x16xf32>, vector<5x16xf32> -> vector<5x16xf32>
    %99 = vector.extract_strided_slice %7 {offsets = [10, 8], sizes = [5, 8], strides = [1, 1]} : vector<30x48xf32> to vector<5x8xf32>
    %100 = vector.extract_strided_slice %7 {offsets = [10, 24], sizes = [5, 8], strides = [1, 1]} : vector<30x48xf32> to vector<5x8xf32>
    %101 = vector.extract_strided_slice %7 {offsets = [10, 40], sizes = [5, 8], strides = [1, 1]} : vector<30x48xf32> to vector<5x8xf32>
    %cst_38 = arith.constant dense<0.000000e+00> : vector<5x5xf32>
    %102 = tpu.matmul %99, %100, %cst_38 {dimension_numbers = #tpu.dot_dimension_numbers<[1], [1], [0], [0], [0, 0, 1, 0], [], []>} : vector<5x8xf32>, vector<5x8xf32>, vector<5x5xf32> -> vector<5x5xf32>
    %cst_39 = arith.constant dense<0xFF800000> : vector<5xf32>
    %103 = vector.multi_reduction <maximumf>, %102, %cst_39 [1] : vector<5x5xf32> to vector<5xf32>
    %104 = vector.shape_cast %103 : vector<5xf32> to vector<5x1xf32>
    %105 = vector.broadcast %104 : vector<5x1xf32> to vector<5x5xf32>
    %106 = arith.subf %102, %105 : vector<5x5xf32>
    %107 = math.exp %106 : vector<5x5xf32>
    %cst_40 = arith.constant dense<0.000000e+00> : vector<5xf32>
    %108 = vector.multi_reduction <add>, %107, %cst_40 [1] : vector<5x5xf32> to vector<5xf32>
    %109 = vector.shape_cast %108 : vector<5xf32> to vector<5x1xf32>
    %110 = tpu.reciprocal %109 {approx = true} : vector<5x1xf32> -> vector<5x1xf32>
    %111 = vector.broadcast %110 : vector<5x1xf32> to vector<5x5xf32>
    %112 = arith.mulf %107, %111 : vector<5x5xf32>
    %cst_41 = arith.constant dense<0.000000e+00> : vector<5x8xf32>
    %113 = tpu.matmul %112, %101, %cst_41 {dimension_numbers = #tpu.dot_dimension_numbers<[1], [0], [0], [1], [0, 0, 1, 1], [], []>} : vector<5x5xf32>, vector<5x8xf32>, vector<5x8xf32> -> vector<5x8xf32>
    %114 = vector.extract_strided_slice %9 {offsets = [8, 0], sizes = [8, 16], strides = [1, 1]} : vector<16x16xf32> to vector<8x16xf32>
    %cst_42 = arith.constant dense<0.000000e+00> : vector<5x16xf32>
    %115 = tpu.matmul %113, %114, %cst_42 {dimension_numbers = #tpu.dot_dimension_numbers<[1], [0], [0], [1], [0, 0, 1, 1], [], []>} : vector<5x8xf32>, vector<8x16xf32>, vector<5x16xf32> -> vector<5x16xf32>
    %116 = arith.addf %98, %115 : vector<5x16xf32>
    %c10 = arith.constant 10 : index
    %c0_43 = arith.constant 0 : index
    %117 = vector.load %arg23[%c10, %c0_43] : memref<30x16xf32, #tpu.memory_space<vmem>>, vector<5x16xf32>
    tpu.vector_store %arg23[%c10, %c0_43], %116 {strides = array<i32>} : memref<30x16xf32, #tpu.memory_space<vmem>>, vector<5x16xf32>,
    %118 = vector.extract_strided_slice %7 {offsets = [15, 0], sizes = [5, 8], strides = [1, 1]} : vector<30x48xf32> to vector<5x8xf32>
    %119 = vector.extract_strided_slice %7 {offsets = [15, 16], sizes = [5, 8], strides = [1, 1]} : vector<30x48xf32> to vector<5x8xf32>
    %120 = vector.extract_strided_slice %7 {offsets = [15, 32], sizes = [5, 8], strides = [1, 1]} : vector<30x48xf32> to vector<5x8xf32>
    %cst_44 = arith.constant dense<0.000000e+00> : vector<5x5xf32>
    %121 = tpu.matmul %118, %119, %cst_44 {dimension_numbers = #tpu.dot_dimension_numbers<[1], [1], [0], [0], [0, 0, 1, 0], [], []>} : vector<5x8xf32>, vector<5x8xf32>, vector<5x5xf32> -> vector<5x5xf32>
    %cst_45 = arith.constant dense<0xFF800000> : vector<5xf32>
    %122 = vector.multi_reduction <maximumf>, %121, %cst_45 [1] : vector<5x5xf32> to vector<5xf32>
    %123 = vector.shape_cast %122 : vector<5xf32> to vector<5x1xf32>
    %124 = vector.broadcast %123 : vector<5x1xf32> to vector<5x5xf32>
    %125 = arith.subf %121, %124 : vector<5x5xf32>
    %126 = math.exp %125 : vector<5x5xf32>
    %cst_46 = arith.constant dense<0.000000e+00> : vector<5xf32>
    %127 = vector.multi_reduction <add>, %126, %cst_46 [1] : vector<5x5xf32> to vector<5xf32>
    %128 = vector.shape_cast %127 : vector<5xf32> to vector<5x1xf32>
    %129 = tpu.reciprocal %128 {approx = true} : vector<5x1xf32> -> vector<5x1xf32>
    %130 = vector.broadcast %129 : vector<5x1xf32> to vector<5x5xf32>
    %131 = arith.mulf %126, %130 : vector<5x5xf32>
    %cst_47 = arith.constant dense<0.000000e+00> : vector<5x8xf32>
    %132 = tpu.matmul %131, %120, %cst_47 {dimension_numbers = #tpu.dot_dimension_numbers<[1], [0], [0], [1], [0, 0, 1, 1], [], []>} : vector<5x5xf32>, vector<5x8xf32>, vector<5x8xf32> -> vector<5x8xf32>
    %133 = vector.extract_strided_slice %9 {offsets = [0, 0], sizes = [8, 16], strides = [1, 1]} : vector<16x16xf32> to vector<8x16xf32>
    %cst_48 = arith.constant dense<0.000000e+00> : vector<5x16xf32>
    %134 = tpu.matmul %132, %133, %cst_48 {dimension_numbers = #tpu.dot_dimension_numbers<[1], [0], [0], [1], [0, 0, 1, 1], [], []>} : vector<5x8xf32>, vector<8x16xf32>, vector<5x16xf32> -> vector<5x16xf32>
    %135 = vector.extract_strided_slice %7 {offsets = [15, 8], sizes = [5, 8], strides = [1, 1]} : vector<30x48xf32> to vector<5x8xf32>
    %136 = vector.extract_strided_slice %7 {offsets = [15, 24], sizes = [5, 8], strides = [1, 1]} : vector<30x48xf32> to vector<5x8xf32>
    %137 = vector.extract_strided_slice %7 {offsets = [15, 40], sizes = [5, 8], strides = [1, 1]} : vector<30x48xf32> to vector<5x8xf32>
    %cst_49 = arith.constant dense<0.000000e+00> : vector<5x5xf32>
    %138 = tpu.matmul %135, %136, %cst_49 {dimension_numbers = #tpu.dot_dimension_numbers<[1], [1], [0], [0], [0, 0, 1, 0], [], []>} : vector<5x8xf32>, vector<5x8xf32>, vector<5x5xf32> -> vector<5x5xf32>
    %cst_50 = arith.constant dense<0xFF800000> : vector<5xf32>
    %139 = vector.multi_reduction <maximumf>, %138, %cst_50 [1] : vector<5x5xf32> to vector<5xf32>
    %140 = vector.shape_cast %139 : vector<5xf32> to vector<5x1xf32>
    %141 = vector.broadcast %140 : vector<5x1xf32> to vector<5x5xf32>
    %142 = arith.subf %138, %141 : vector<5x5xf32>
    %143 = math.exp %142 : vector<5x5xf32>
    %cst_51 = arith.constant dense<0.000000e+00> : vector<5xf32>
    %144 = vector.multi_reduction <add>, %143, %cst_51 [1] : vector<5x5xf32> to vector<5xf32>
    %145 = vector.shape_cast %144 : vector<5xf32> to vector<5x1xf32>
    %146 = tpu.reciprocal %145 {approx = true} : vector<5x1xf32> -> vector<5x1xf32>
    %147 = vector.broadcast %146 : vector<5x1xf32> to vector<5x5xf32>
    %148 = arith.mulf %143, %147 : vector<5x5xf32>
    %cst_52 = arith.constant dense<0.000000e+00> : vector<5x8xf32>
    %149 = tpu.matmul %148, %137, %cst_52 {dimension_numbers = #tpu.dot_dimension_numbers<[1], [0], [0], [1], [0, 0, 1, 1], [], []>} : vector<5x5xf32>, vector<5x8xf32>, vector<5x8xf32> -> vector<5x8xf32>
    %150 = vector.extract_strided_slice %9 {offsets = [8, 0], sizes = [8, 16], strides = [1, 1]} : vector<16x16xf32> to vector<8x16xf32>
    %cst_53 = arith.constant dense<0.000000e+00> : vector<5x16xf32>
    %151 = tpu.matmul %149, %150, %cst_53 {dimension_numbers = #tpu.dot_dimension_numbers<[1], [0], [0], [1], [0, 0, 1, 1], [], []>} : vector<5x8xf32>, vector<8x16xf32>, vector<5x16xf32> -> vector<5x16xf32>
    %152 = arith.addf %134, %151 : vector<5x16xf32>
    %c15 = arith.constant 15 : index
    %c0_54 = arith.constant 0 : index
    %153 = vector.load %arg23[%c15, %c0_54] : memref<30x16xf32, #tpu.memory_space<vmem>>, vector<5x16xf32>
    tpu.vector_store %arg23[%c15, %c0_54], %152 {strides = array<i32>} : memref<30x16xf32, #tpu.memory_space<vmem>>, vector<5x16xf32>,
    %154 = vector.extract_strided_slice %7 {offsets = [20, 0], sizes = [5, 8], strides = [1, 1]} : vector<30x48xf32> to vector<5x8xf32>
    %155 = vector.extract_strided_slice %7 {offsets = [20, 16], sizes = [5, 8], strides = [1, 1]} : vector<30x48xf32> to vector<5x8xf32>
    %156 = vector.extract_strided_slice %7 {offsets = [20, 32], sizes = [5, 8], strides = [1, 1]} : vector<30x48xf32> to vector<5x8xf32>
    %cst_55 = arith.constant dense<0.000000e+00> : vector<5x5xf32>
    %157 = tpu.matmul %154, %155, %cst_55 {dimension_numbers = #tpu.dot_dimension_numbers<[1], [1], [0], [0], [0, 0, 1, 0], [], []>} : vector<5x8xf32>, vector<5x8xf32>, vector<5x5xf32> -> vector<5x5xf32>
    %cst_56 = arith.constant dense<0xFF800000> : vector<5xf32>
    %158 = vector.multi_reduction <maximumf>, %157, %cst_56 [1] : vector<5x5xf32> to vector<5xf32>
    %159 = vector.shape_cast %158 : vector<5xf32> to vector<5x1xf32>
    %160 = vector.broadcast %159 : vector<5x1xf32> to vector<5x5xf32>
    %161 = arith.subf %157, %160 : vector<5x5xf32>
    %162 = math.exp %161 : vector<5x5xf32>
    %cst_57 = arith.constant dense<0.000000e+00> : vector<5xf32>
    %163 = vector.multi_reduction <add>, %162, %cst_57 [1] : vector<5x5xf32> to vector<5xf32>
    %164 = vector.shape_cast %163 : vector<5xf32> to vector<5x1xf32>
    %165 = tpu.reciprocal %164 {approx = true} : vector<5x1xf32> -> vector<5x1xf32>
    %166 = vector.broadcast %165 : vector<5x1xf32> to vector<5x5xf32>
    %167 = arith.mulf %162, %166 : vector<5x5xf32>
    %cst_58 = arith.constant dense<0.000000e+00> : vector<5x8xf32>
    %168 = tpu.matmul %167, %156, %cst_58 {dimension_numbers = #tpu.dot_dimension_numbers<[1], [0], [0], [1], [0, 0, 1, 1], [], []>} : vector<5x5xf32>, vector<5x8xf32>, vector<5x8xf32> -> vector<5x8xf32>
    %169 = vector.extract_strided_slice %9 {offsets = [0, 0], sizes = [8, 16], strides = [1, 1]} : vector<16x16xf32> to vector<8x16xf32>
    %cst_59 = arith.constant dense<0.000000e+00> : vector<5x16xf32>
    %170 = tpu.matmul %168, %169, %cst_59 {dimension_numbers = #tpu.dot_dimension_numbers<[1], [0], [0], [1], [0, 0, 1, 1], [], []>} : vector<5x8xf32>, vector<8x16xf32>, vector<5x16xf32> -> vector<5x16xf32>
    %171 = vector.extract_strided_slice %7 {offsets = [20, 8], sizes = [5, 8], strides = [1, 1]} : vector<30x48xf32> to vector<5x8xf32>
    %172 = vector.extract_strided_slice %7 {offsets = [20, 24], sizes = [5, 8], strides = [1, 1]} : vector<30x48xf32> to vector<5x8xf32>
    %173 = vector.extract_strided_slice %7 {offsets = [20, 40], sizes = [5, 8], strides = [1, 1]} : vector<30x48xf32> to vector<5x8xf32>
    %cst_60 = arith.constant dense<0.000000e+00> : vector<5x5xf32>
    %174 = tpu.matmul %171, %172, %cst_60 {dimension_numbers = #tpu.dot_dimension_numbers<[1], [1], [0], [0], [0, 0, 1, 0], [], []>} : vector<5x8xf32>, vector<5x8xf32>, vector<5x5xf32> -> vector<5x5xf32>
    %cst_61 = arith.constant dense<0xFF800000> : vector<5xf32>
    %175 = vector.multi_reduction <maximumf>, %174, %cst_61 [1] : vector<5x5xf32> to vector<5xf32>
    %176 = vector.shape_cast %175 : vector<5xf32> to vector<5x1xf32>
    %177 = vector.broadcast %176 : vector<5x1xf32> to vector<5x5xf32>
    %178 = arith.subf %174, %177 : vector<5x5xf32>
    %179 = math.exp %178 : vector<5x5xf32>
    %cst_62 = arith.constant dense<0.000000e+00> : vector<5xf32>
    %180 = vector.multi_reduction <add>, %179, %cst_62 [1] : vector<5x5xf32> to vector<5xf32>
    %181 = vector.shape_cast %180 : vector<5xf32> to vector<5x1xf32>
    %182 = tpu.reciprocal %181 {approx = true} : vector<5x1xf32> -> vector<5x1xf32>
    %183 = vector.broadcast %182 : vector<5x1xf32> to vector<5x5xf32>
    %184 = arith.mulf %179, %183 : vector<5x5xf32>
    %cst_63 = arith.constant dense<0.000000e+00> : vector<5x8xf32>
    %185 = tpu.matmul %184, %173, %cst_63 {dimension_numbers = #tpu.dot_dimension_numbers<[1], [0], [0], [1], [0, 0, 1, 1], [], []>} : vector<5x5xf32>, vector<5x8xf32>, vector<5x8xf32> -> vector<5x8xf32>
    %186 = vector.extract_strided_slice %9 {offsets = [8, 0], sizes = [8, 16], strides = [1, 1]} : vector<16x16xf32> to vector<8x16xf32>
    %cst_64 = arith.constant dense<0.000000e+00> : vector<5x16xf32>
    %187 = tpu.matmul %185, %186, %cst_64 {dimension_numbers = #tpu.dot_dimension_numbers<[1], [0], [0], [1], [0, 0, 1, 1], [], []>} : vector<5x8xf32>, vector<8x16xf32>, vector<5x16xf32> -> vector<5x16xf32>
    %188 = arith.addf %170, %187 : vector<5x16xf32>
    %c20 = arith.constant 20 : index
    %c0_65 = arith.constant 0 : index
    %189 = vector.load %arg23[%c20, %c0_65] : memref<30x16xf32, #tpu.memory_space<vmem>>, vector<5x16xf32>
    tpu.vector_store %arg23[%c20, %c0_65], %188 {strides = array<i32>} : memref<30x16xf32, #tpu.memory_space<vmem>>, vector<5x16xf32>,
    %190 = vector.extract_strided_slice %7 {offsets = [25, 0], sizes = [5, 8], strides = [1, 1]} : vector<30x48xf32> to vector<5x8xf32>
    %191 = vector.extract_strided_slice %7 {offsets = [25, 16], sizes = [5, 8], strides = [1, 1]} : vector<30x48xf32> to vector<5x8xf32>
    %192 = vector.extract_strided_slice %7 {offsets = [25, 32], sizes = [5, 8], strides = [1, 1]} : vector<30x48xf32> to vector<5x8xf32>
    %cst_66 = arith.constant dense<0.000000e+00> : vector<5x5xf32>
    %193 = tpu.matmul %190, %191, %cst_66 {dimension_numbers = #tpu.dot_dimension_numbers<[1], [1], [0], [0], [0, 0, 1, 0], [], []>} : vector<5x8xf32>, vector<5x8xf32>, vector<5x5xf32> -> vector<5x5xf32>
    %cst_67 = arith.constant dense<0xFF800000> : vector<5xf32>
    %194 = vector.multi_reduction <maximumf>, %193, %cst_67 [1] : vector<5x5xf32> to vector<5xf32>
    %195 = vector.shape_cast %194 : vector<5xf32> to vector<5x1xf32>
    %196 = vector.broadcast %195 : vector<5x1xf32> to vector<5x5xf32>
    %197 = arith.subf %193, %196 : vector<5x5xf32>
    %198 = math.exp %197 : vector<5x5xf32>
    %cst_68 = arith.constant dense<0.000000e+00> : vector<5xf32>
    %199 = vector.multi_reduction <add>, %198, %cst_68 [1] : vector<5x5xf32> to vector<5xf32>
    %200 = vector.shape_cast %199 : vector<5xf32> to vector<5x1xf32>
    %201 = tpu.reciprocal %200 {approx = true} : vector<5x1xf32> -> vector<5x1xf32>
    %202 = vector.broadcast %201 : vector<5x1xf32> to vector<5x5xf32>
    %203 = arith.mulf %198, %202 : vector<5x5xf32>
    %cst_69 = arith.constant dense<0.000000e+00> : vector<5x8xf32>
    %204 = tpu.matmul %203, %192, %cst_69 {dimension_numbers = #tpu.dot_dimension_numbers<[1], [0], [0], [1], [0, 0, 1, 1], [], []>} : vector<5x5xf32>, vector<5x8xf32>, vector<5x8xf32> -> vector<5x8xf32>
    %205 = vector.extract_strided_slice %9 {offsets = [0, 0], sizes = [8, 16], strides = [1, 1]} : vector<16x16xf32> to vector<8x16xf32>
    %cst_70 = arith.constant dense<0.000000e+00> : vector<5x16xf32>
    %206 = tpu.matmul %204, %205, %cst_70 {dimension_numbers = #tpu.dot_dimension_numbers<[1], [0], [0], [1], [0, 0, 1, 1], [], []>} : vector<5x8xf32>, vector<8x16xf32>, vector<5x16xf32> -> vector<5x16xf32>
    %207 = vector.extract_strided_slice %7 {offsets = [25, 8], sizes = [5, 8], strides = [1, 1]} : vector<30x48xf32> to vector<5x8xf32>
    %208 = vector.extract_strided_slice %7 {offsets = [25, 24], sizes = [5, 8], strides = [1, 1]} : vector<30x48xf32> to vector<5x8xf32>
    %209 = vector.extract_strided_slice %7 {offsets = [25, 40], sizes = [5, 8], strides = [1, 1]} : vector<30x48xf32> to vector<5x8xf32>
    %cst_71 = arith.constant dense<0.000000e+00> : vector<5x5xf32>
    %210 = tpu.matmul %207, %208, %cst_71 {dimension_numbers = #tpu.dot_dimension_numbers<[1], [1], [0], [0], [0, 0, 1, 0], [], []>} : vector<5x8xf32>, vector<5x8xf32>, vector<5x5xf32> -> vector<5x5xf32>
    %cst_72 = arith.constant dense<0xFF800000> : vector<5xf32>
    %211 = vector.multi_reduction <maximumf>, %210, %cst_72 [1] : vector<5x5xf32> to vector<5xf32>
    %212 = vector.shape_cast %211 : vector<5xf32> to vector<5x1xf32>
    %213 = vector.broadcast %212 : vector<5x1xf32> to vector<5x5xf32>
    %214 = arith.subf %210, %213 : vector<5x5xf32>
    %215 = math.exp %214 : vector<5x5xf32>
    %cst_73 = arith.constant dense<0.000000e+00> : vector<5xf32>
    %216 = vector.multi_reduction <add>, %215, %cst_73 [1] : vector<5x5xf32> to vector<5xf32>
    %217 = vector.shape_cast %216 : vector<5xf32> to vector<5x1xf32>
    %218 = tpu.reciprocal %217 {approx = true} : vector<5x1xf32> -> vector<5x1xf32>
    %219 = vector.broadcast %218 : vector<5x1xf32> to vector<5x5xf32>
    %220 = arith.mulf %215, %219 : vector<5x5xf32>
    %cst_74 = arith.constant dense<0.000000e+00> : vector<5x8xf32>
    %221 = tpu.matmul %220, %209, %cst_74 {dimension_numbers = #tpu.dot_dimension_numbers<[1], [0], [0], [1], [0, 0, 1, 1], [], []>} : vector<5x5xf32>, vector<5x8xf32>, vector<5x8xf32> -> vector<5x8xf32>
    %222 = vector.extract_strided_slice %9 {offsets = [8, 0], sizes = [8, 16], strides = [1, 1]} : vector<16x16xf32> to vector<8x16xf32>
    %cst_75 = arith.constant dense<0.000000e+00> : vector<5x16xf32>
    %223 = tpu.matmul %221, %222, %cst_75 {dimension_numbers = #tpu.dot_dimension_numbers<[1], [0], [0], [1], [0, 0, 1, 1], [], []>} : vector<5x8xf32>, vector<8x16xf32>, vector<5x16xf32> -> vector<5x16xf32>
    %224 = arith.addf %206, %223 : vector<5x16xf32>
    %c25 = arith.constant 25 : index
    %c0_76 = arith.constant 0 : index
    %225 = vector.load %arg23[%c25, %c0_76] : memref<30x16xf32, #tpu.memory_space<vmem>>, vector<5x16xf32>
    tpu.vector_store %arg23[%c25, %c0_76], %224 {strides = array<i32>} : memref<30x16xf32, #tpu.memory_space<vmem>>, vector<5x16xf32>,
    %c0_77 = arith.constant 0 : index
    %c0_78 = arith.constant 0 : index
    %226 = vector.load %arg23[%c0_77, %c0_78] : memref<30x16xf32, #tpu.memory_space<vmem>>, vector<30x16xf32>
    %227 = arith.addf %0, %226 : vector<30x16xf32>
    %c0_79 = arith.constant 0 : index
    %c0_80 = arith.constant 0 : index
    %c0_81 = arith.constant 0 : index
    %228 = vector.load %arg9[%c0_79, %c0_80, %c0_81] : memref<1x1x16xf32, #tpu.memory_space<vmem>>, vector<1x1x16xf32>
    %229 = vector.shape_cast %228 : vector<1x1x16xf32> to vector<1x16xf32>
    %230 = vector.broadcast %229 : vector<1x16xf32> to vector<30x16xf32>
    %231 = arith.addf %227, %230 : vector<30x16xf32>
    %c0_82 = arith.constant 0 : index
    %c0_83 = arith.constant 0 : index
    %c0_84 = arith.constant 0 : index
    %232 = vector.load %arg4[%c0_82, %c0_83, %c0_84] : memref<1x1x16xf32, #tpu.memory_space<vmem>>, vector<1x1x16xf32>
    %233 = vector.shape_cast %232 : vector<1x1x16xf32> to vector<1x16xf32>
    %c0_85 = arith.constant 0 : index
    %c0_86 = arith.constant 0 : index
    %c0_87 = arith.constant 0 : index
    %234 = vector.load %arg5[%c0_85, %c0_86, %c0_87] : memref<1x1x16xf32, #tpu.memory_space<vmem>>, vector<1x1x16xf32>
    %235 = vector.shape_cast %234 : vector<1x1x16xf32> to vector<1x16xf32>
    %cst_88 = arith.constant dense<0.000000e+00> : vector<30xf32>
    %236 = vector.multi_reduction <add>, %231, %cst_88 [1] : vector<30x16xf32> to vector<30xf32>
    %237 = vector.shape_cast %236 : vector<30xf32> to vector<30x1xf32>
    %cst_89 = arith.constant 1.600000e+01 : f32
    %238 = vector.broadcast %cst_89 : f32 to vector<30x1xf32>
    %239 = arith.divf %237, %238 : vector<30x1xf32>
    %240 = vector.broadcast %239 : vector<30x1xf32> to vector<30x16xf32>
    %241 = arith.subf %231, %240 : vector<30x16xf32>
    %242 = arith.mulf %241, %241 : vector<30x16xf32>
    %cst_90 = arith.constant dense<0.000000e+00> : vector<30xf32>
    %243 = vector.multi_reduction <add>, %242, %cst_90 [1] : vector<30x16xf32> to vector<30xf32>
    %244 = vector.shape_cast %243 : vector<30xf32> to vector<30x1xf32>
    %cst_91 = arith.constant 1.600000e+01 : f32
    %245 = vector.broadcast %cst_91 : f32 to vector<30x1xf32>
    %246 = arith.divf %244, %245 : vector<30x1xf32>
    %247 = vector.broadcast %239 : vector<30x1xf32> to vector<30x16xf32>
    %248 = arith.subf %231, %247 : vector<30x16xf32>
    %cst_92 = arith.constant 9.99999974E-6 : f32
    %249 = vector.broadcast %cst_92 : f32 to vector<30x1xf32>
    %250 = arith.addf %246, %249 : vector<30x1xf32>
    %251 = math.rsqrt %250 : vector<30x1xf32>
    %252 = vector.broadcast %251 : vector<30x1xf32> to vector<30x16xf32>
    %253 = arith.mulf %248, %252 : vector<30x16xf32>
    %254 = vector.broadcast %233 : vector<1x16xf32> to vector<30x16xf32>
    %255 = arith.mulf %253, %254 : vector<30x16xf32>
    %256 = vector.broadcast %235 : vector<1x16xf32> to vector<30x16xf32>
    %257 = arith.addf %255, %256 : vector<30x16xf32>
    %c0_93 = arith.constant 0 : index
    %c0_94 = arith.constant 0 : index
    %c0_95 = arith.constant 0 : index
    %258 = vector.load %arg12[%c0_93, %c0_94, %c0_95] : memref<1x16x32xf32, #tpu.memory_space<vmem>>, vector<1x16x32xf32>
    %259 = vector.shape_cast %258 : vector<1x16x32xf32> to vector<16x32xf32>
    %cst_96 = arith.constant dense<0.000000e+00> : vector<30x32xf32>
    %260 = tpu.matmul %257, %259, %cst_96 {dimension_numbers = #tpu.dot_dimension_numbers<[1], [0], [0], [1], [0, 0, 1, 1], [], []>} : vector<30x16xf32>, vector<16x32xf32>, vector<30x32xf32> -> vector<30x32xf32>
    %c0_97 = arith.constant 0 : index
    %c0_98 = arith.constant 0 : index
    %c0_99 = arith.constant 0 : index
    %261 = vector.load %arg13[%c0_97, %c0_98, %c0_99] : memref<1x1x32xf32, #tpu.memory_space<vmem>>, vector<1x1x32xf32>
    %262 = vector.shape_cast %261 : vector<1x1x32xf32> to vector<1x32xf32>
    %263 = vector.broadcast %262 : vector<1x32xf32> to vector<30x32xf32>
    %264 = arith.addf %260, %263 : vector<30x32xf32>
    %cst_100 = arith.constant 0.000000e+00 : f32
    %265 = vector.broadcast %cst_100 : f32 to vector<30x32xf32>
    %266 = arith.maximumf %264, %265 : vector<30x32xf32>
    %c0_101 = arith.constant 0 : index
    %c0_102 = arith.constant 0 : index
    %c0_103 = arith.constant 0 : index
    %267 = vector.load %arg14[%c0_101, %c0_102, %c0_103] : memref<1x32x16xf32, #tpu.memory_space<vmem>>, vector<1x32x16xf32>
    %268 = vector.shape_cast %267 : vector<1x32x16xf32> to vector<32x16xf32>
    %cst_104 = arith.constant dense<0.000000e+00> : vector<30x16xf32>
    %269 = tpu.matmul %266, %268, %cst_104 {dimension_numbers = #tpu.dot_dimension_numbers<[1], [0], [0], [1], [0, 0, 1, 1], [], []>} : vector<30x32xf32>, vector<32x16xf32>, vector<30x16xf32> -> vector<30x16xf32>
    %c0_105 = arith.constant 0 : index
    %c0_106 = arith.constant 0 : index
    %c0_107 = arith.constant 0 : index
    %270 = vector.load %arg15[%c0_105, %c0_106, %c0_107] : memref<1x1x16xf32, #tpu.memory_space<vmem>>, vector<1x1x16xf32>
    %271 = vector.shape_cast %270 : vector<1x1x16xf32> to vector<1x16xf32>
    %272 = vector.broadcast %271 : vector<1x16xf32> to vector<30x16xf32>
    %273 = arith.addf %269, %272 : vector<30x16xf32>
    %274 = arith.addf %257, %273 : vector<30x16xf32>
    %c0_108 = arith.constant 0 : index
    %c0_109 = arith.constant 0 : index
    %c0_110 = arith.constant 0 : index
    %275 = vector.load %arg10[%c0_108, %c0_109, %c0_110] : memref<1x1x16xf32, #tpu.memory_space<vmem>>, vector<1x1x16xf32>
    %276 = vector.shape_cast %275 : vector<1x1x16xf32> to vector<1x16xf32>
    %c0_111 = arith.constant 0 : index
    %c0_112 = arith.constant 0 : index
    %c0_113 = arith.constant 0 : index
    %277 = vector.load %arg11[%c0_111, %c0_112, %c0_113] : memref<1x1x16xf32, #tpu.memory_space<vmem>>, vector<1x1x16xf32>
    %278 = vector.shape_cast %277 : vector<1x1x16xf32> to vector<1x16xf32>
    %cst_114 = arith.constant dense<0.000000e+00> : vector<30xf32>
    %279 = vector.multi_reduction <add>, %274, %cst_114 [1] : vector<30x16xf32> to vector<30xf32>
    %280 = vector.shape_cast %279 : vector<30xf32> to vector<30x1xf32>
    %cst_115 = arith.constant 1.600000e+01 : f32
    %281 = vector.broadcast %cst_115 : f32 to vector<30x1xf32>
    %282 = arith.divf %280, %281 : vector<30x1xf32>
    %283 = vector.broadcast %282 : vector<30x1xf32> to vector<30x16xf32>
    %284 = arith.subf %274, %283 : vector<30x16xf32>
    %285 = arith.mulf %284, %284 : vector<30x16xf32>
    %cst_116 = arith.constant dense<0.000000e+00> : vector<30xf32>
    %286 = vector.multi_reduction <add>, %285, %cst_116 [1] : vector<30x16xf32> to vector<30xf32>
    %287 = vector.shape_cast %286 : vector<30xf32> to vector<30x1xf32>
    %cst_117 = arith.constant 1.600000e+01 : f32
    %288 = vector.broadcast %cst_117 : f32 to vector<30x1xf32>
    %289 = arith.divf %287, %288 : vector<30x1xf32>
    %290 = vector.broadcast %282 : vector<30x1xf32> to vector<30x16xf32>
    %291 = arith.subf %274, %290 : vector<30x16xf32>
    %cst_118 = arith.constant 9.99999974E-6 : f32
    %292 = vector.broadcast %cst_118 : f32 to vector<30x1xf32>
    %293 = arith.addf %289, %292 : vector<30x1xf32>
    %294 = math.rsqrt %293 : vector<30x1xf32>
    %295 = vector.broadcast %294 : vector<30x1xf32> to vector<30x16xf32>
    %296 = arith.mulf %291, %295 : vector<30x16xf32>
    %297 = vector.broadcast %276 : vector<1x16xf32> to vector<30x16xf32>
    %298 = arith.mulf %296, %297 : vector<30x16xf32>
    %299 = vector.broadcast %278 : vector<1x16xf32> to vector<30x16xf32>
    %300 = arith.addf %298, %299 : vector<30x16xf32>
    %301 = vector.extract_strided_slice %300 {offsets = [0, 0], sizes = [5, 16], strides = [1, 1]} : vector<30x16xf32> to vector<5x16xf32>
    %cst_119 = arith.constant dense<0xFF800000> : vector<16xf32>
    %302 = vector.multi_reduction <maximumf>, %301, %cst_119 [0] : vector<5x16xf32> to vector<16xf32>
    %303 = vector.shape_cast %302 : vector<16xf32> to vector<1x16xf32>
    %c0_120 = arith.constant 0 : index
    %c0_121 = arith.constant 0 : index
    %304 = vector.load %arg24[%c0_120, %c0_121] : memref<6x16xf32, #tpu.memory_space<vmem>>, vector<1x16xf32>
    tpu.vector_store %arg24[%c0_120, %c0_121], %303 {strides = array<i32>} : memref<6x16xf32, #tpu.memory_space<vmem>>, vector<1x16xf32>,
    %305 = vector.extract_strided_slice %300 {offsets = [5, 0], sizes = [5, 16], strides = [1, 1]} : vector<30x16xf32> to vector<5x16xf32>
    %cst_122 = arith.constant dense<0xFF800000> : vector<16xf32>
    %306 = vector.multi_reduction <maximumf>, %305, %cst_122 [0] : vector<5x16xf32> to vector<16xf32>
    %307 = vector.shape_cast %306 : vector<16xf32> to vector<1x16xf32>
    %c1 = arith.constant 1 : index
    %c0_123 = arith.constant 0 : index
    %308 = vector.load %arg24[%c1, %c0_123] : memref<6x16xf32, #tpu.memory_space<vmem>>, vector<1x16xf32>
    tpu.vector_store %arg24[%c1, %c0_123], %307 {strides = array<i32>} : memref<6x16xf32, #tpu.memory_space<vmem>>, vector<1x16xf32>,
    %309 = vector.extract_strided_slice %300 {offsets = [10, 0], sizes = [5, 16], strides = [1, 1]} : vector<30x16xf32> to vector<5x16xf32>
    %cst_124 = arith.constant dense<0xFF800000> : vector<16xf32>
    %310 = vector.multi_reduction <maximumf>, %309, %cst_124 [0] : vector<5x16xf32> to vector<16xf32>
    %311 = vector.shape_cast %310 : vector<16xf32> to vector<1x16xf32>
    %c2 = arith.constant 2 : index
    %c0_125 = arith.constant 0 : index
    %312 = vector.load %arg24[%c2, %c0_125] : memref<6x16xf32, #tpu.memory_space<vmem>>, vector<1x16xf32>
    tpu.vector_store %arg24[%c2, %c0_125], %311 {strides = array<i32>} : memref<6x16xf32, #tpu.memory_space<vmem>>, vector<1x16xf32>,
    %313 = vector.extract_strided_slice %300 {offsets = [15, 0], sizes = [5, 16], strides = [1, 1]} : vector<30x16xf32> to vector<5x16xf32>
    %cst_126 = arith.constant dense<0xFF800000> : vector<16xf32>
    %314 = vector.multi_reduction <maximumf>, %313, %cst_126 [0] : vector<5x16xf32> to vector<16xf32>
    %315 = vector.shape_cast %314 : vector<16xf32> to vector<1x16xf32>
    %c3 = arith.constant 3 : index
    %c0_127 = arith.constant 0 : index
    %316 = vector.load %arg24[%c3, %c0_127] : memref<6x16xf32, #tpu.memory_space<vmem>>, vector<1x16xf32>
    tpu.vector_store %arg24[%c3, %c0_127], %315 {strides = array<i32>} : memref<6x16xf32, #tpu.memory_space<vmem>>, vector<1x16xf32>,
    %317 = vector.extract_strided_slice %300 {offsets = [20, 0], sizes = [5, 16], strides = [1, 1]} : vector<30x16xf32> to vector<5x16xf32>
    %cst_128 = arith.constant dense<0xFF800000> : vector<16xf32>
    %318 = vector.multi_reduction <maximumf>, %317, %cst_128 [0] : vector<5x16xf32> to vector<16xf32>
    %319 = vector.shape_cast %318 : vector<16xf32> to vector<1x16xf32>
    %c4 = arith.constant 4 : index
    %c0_129 = arith.constant 0 : index
    %320 = vector.load %arg24[%c4, %c0_129] : memref<6x16xf32, #tpu.memory_space<vmem>>, vector<1x16xf32>
    tpu.vector_store %arg24[%c4, %c0_129], %319 {strides = array<i32>} : memref<6x16xf32, #tpu.memory_space<vmem>>, vector<1x16xf32>,
    %321 = vector.extract_strided_slice %300 {offsets = [25, 0], sizes = [5, 16], strides = [1, 1]} : vector<30x16xf32> to vector<5x16xf32>
    %cst_130 = arith.constant dense<0xFF800000> : vector<16xf32>
    %322 = vector.multi_reduction <maximumf>, %321, %cst_130 [0] : vector<5x16xf32> to vector<16xf32>
    %323 = vector.shape_cast %322 : vector<16xf32> to vector<1x16xf32>
    %c5_131 = arith.constant 5 : index
    %c0_132 = arith.constant 0 : index
    %324 = vector.load %arg24[%c5_131, %c0_132] : memref<6x16xf32, #tpu.memory_space<vmem>>, vector<1x16xf32>
    tpu.vector_store %arg24[%c5_131, %c0_132], %323 {strides = array<i32>} : memref<6x16xf32, #tpu.memory_space<vmem>>, vector<1x16xf32>,
    %c0_133 = arith.constant 0 : index
    %c0_134 = arith.constant 0 : index
    %325 = vector.load %arg24[%c0_133, %c0_134] : memref<6x16xf32, #tpu.memory_space<vmem>>, vector<6x16xf32>
    %c0_135 = arith.constant 0 : index
    %c0_136 = arith.constant 0 : index
    %326 = vector.load %arg16[%c0_135, %c0_136] : memref<16x32xf32, #tpu.memory_space<vmem>>, vector<16x32xf32>
    %cst_137 = arith.constant dense<0.000000e+00> : vector<6x32xf32>
    %327 = tpu.matmul %325, %326, %cst_137 {dimension_numbers = #tpu.dot_dimension_numbers<[1], [0], [0], [1], [0, 0, 1, 1], [], []>} : vector<6x16xf32>, vector<16x32xf32>, vector<6x32xf32> -> vector<6x32xf32>
    %c0_138 = arith.constant 0 : index
    %c0_139 = arith.constant 0 : index
    %328 = vector.load %arg17[%c0_138, %c0_139] : memref<1x32xf32, #tpu.memory_space<vmem>>, vector<1x32xf32>
    %329 = vector.broadcast %328 : vector<1x32xf32> to vector<6x32xf32>
    %330 = arith.addf %327, %329 : vector<6x32xf32>
    %cst_140 = arith.constant 0.000000e+00 : f32
    %331 = vector.broadcast %cst_140 : f32 to vector<6x32xf32>
    %332 = arith.maximumf %330, %331 : vector<6x32xf32>
    %c0_141 = arith.constant 0 : index
    %c0_142 = arith.constant 0 : index
    %333 = vector.load %arg2[%c0_141, %c0_142] : memref<6x34xf32, #tpu.memory_space<vmem>>, vector<6x34xf32>
    %c0_143 = arith.constant 0 : index
    %c0_144 = arith.constant 0 : index
    %334 = vector.load %arg18[%c0_143, %c0_144] : memref<34x32xf32, #tpu.memory_space<vmem>>, vector<34x32xf32>
    %cst_145 = arith.constant dense<0.000000e+00> : vector<6x32xf32>
    %335 = tpu.matmul %333, %334, %cst_145 {dimension_numbers = #tpu.dot_dimension_numbers<[1], [0], [0], [1], [0, 0, 1, 1], [], []>} : vector<6x34xf32>, vector<34x32xf32>, vector<6x32xf32> -> vector<6x32xf32>
    %c0_146 = arith.constant 0 : index
    %c0_147 = arith.constant 0 : index
    %336 = vector.load %arg19[%c0_146, %c0_147] : memref<1x32xf32, #tpu.memory_space<vmem>>, vector<1x32xf32>
    %337 = vector.broadcast %336 : vector<1x32xf32> to vector<6x32xf32>
    %338 = arith.addf %335, %337 : vector<6x32xf32>
    %cst_148 = arith.constant 0.000000e+00 : f32
    %339 = vector.broadcast %cst_148 : f32 to vector<6x32xf32>
    %340 = arith.maximumf %338, %339 : vector<6x32xf32>
    %c0_149 = arith.constant 0 : index
    %c0_150 = arith.constant 0 : index
    %341 = vector.load %arg20[%c0_149, %c0_150] : memref<32x32xf32, #tpu.memory_space<vmem>>, vector<32x32xf32>
    %cst_151 = arith.constant dense<0.000000e+00> : vector<6x32xf32>
    %342 = tpu.matmul %340, %341, %cst_151 {dimension_numbers = #tpu.dot_dimension_numbers<[1], [0], [0], [1], [0, 0, 1, 1], [], []>} : vector<6x32xf32>, vector<32x32xf32>, vector<6x32xf32> -> vector<6x32xf32>
    %c0_152 = arith.constant 0 : index
    %c0_153 = arith.constant 0 : index
    %343 = vector.load %arg21[%c0_152, %c0_153] : memref<1x32xf32, #tpu.memory_space<vmem>>, vector<1x32xf32>
    %344 = vector.broadcast %343 : vector<1x32xf32> to vector<6x32xf32>
    %345 = arith.addf %342, %344 : vector<6x32xf32>
    %346 = arith.addf %332, %345 : vector<6x32xf32>
    %c0_154 = arith.constant 0 : index
    %c0_155 = arith.constant 0 : index
    %347 = vector.load %arg3[%c0_154, %c0_155] : memref<6x1xf32, #tpu.memory_space<vmem>>, vector<6x1xf32>
    %348 = vector.broadcast %347 : vector<6x1xf32> to vector<6x32xf32>
    %349 = arith.mulf %346, %348 : vector<6x32xf32>
    %c0_156 = arith.constant 0 : index
    %c0_157 = arith.constant 0 : index
    %350 = vector.load %arg22[%c0_156, %c0_157] : memref<6x32xf32, #tpu.memory_space<vmem>>, vector<6x32xf32>
    tpu.vector_store %arg22[%c0_156, %c0_157], %349 {strides = array<i32>} : memref<6x32xf32, #tpu.memory_space<vmem>>, vector<6x32xf32>,
    return
  }
  func.func @transform_0(%arg0: i32) -> (i32, i32) {
    %c0_i32 = arith.constant 0 : i32
    %c0_i32_0 = arith.constant 0 : i32
    %c0_i32_1 = arith.constant 0 : i32
    return %c0_i32, %c0_i32_0 : i32, i32
  }
  func.func @transform_1(%arg0: i32) -> (i32, i32) {
    %c0_i32 = arith.constant 0 : i32
    %c0_i32_0 = arith.constant 0 : i32
    %c0_i32_1 = arith.constant 0 : i32
    return %c0_i32, %c0_i32_0 : i32, i32
  }
  func.func @transform_2(%arg0: i32) -> (i32, i32) {
    %c0_i32 = arith.constant 0 : i32
    %c0_i32_0 = arith.constant 0 : i32
    %c0_i32_1 = arith.constant 0 : i32
    return %c0_i32, %c0_i32_0 : i32, i32
  }
  func.func @transform_3(%arg0: i32) -> (i32, i32, i32) {
    %c0_i32 = arith.constant 0 : i32
    %c0_i32_0 = arith.constant 0 : i32
    %c0_i32_1 = arith.constant 0 : i32
    %c0_i32_2 = arith.constant 0 : i32
    return %c0_i32, %c0_i32_0, %c0_i32_1 : i32, i32, i32
  }
  func.func @transform_4(%arg0: i32) -> (i32, i32, i32) {
    %c0_i32 = arith.constant 0 : i32
    %c0_i32_0 = arith.constant 0 : i32
    %c0_i32_1 = arith.constant 0 : i32
    %c0_i32_2 = arith.constant 0 : i32
    return %c0_i32, %c0_i32_0, %c0_i32_1 : i32, i32, i32
  }
  func.func @transform_5(%arg0: i32) -> (i32, i32, i32) {
    %c0_i32 = arith.constant 0 : i32
    %c0_i32_0 = arith.constant 0 : i32
    %c0_i32_1 = arith.constant 0 : i32
    %c0_i32_2 = arith.constant 0 : i32
    return %c0_i32, %c0_i32_0, %c0_i32_1 : i32, i32, i32
  }
  func.func @transform_6(%arg0: i32) -> (i32, i32, i32) {
    %c0_i32 = arith.constant 0 : i32
    %c0_i32_0 = arith.constant 0 : i32
    %c0_i32_1 = arith.constant 0 : i32
    %c0_i32_2 = arith.constant 0 : i32
    return %c0_i32, %c0_i32_0, %c0_i32_1 : i32, i32, i32
  }
  func.func @transform_7(%arg0: i32) -> (i32, i32, i32) {
    %c0_i32 = arith.constant 0 : i32
    %c0_i32_0 = arith.constant 0 : i32
    %c0_i32_1 = arith.constant 0 : i32
    %c0_i32_2 = arith.constant 0 : i32
    return %c0_i32, %c0_i32_0, %c0_i32_1 : i32, i32, i32
  }
  func.func @transform_8(%arg0: i32) -> (i32, i32, i32) {
    %c0_i32 = arith.constant 0 : i32
    %c0_i32_0 = arith.constant 0 : i32
    %c0_i32_1 = arith.constant 0 : i32
    %c0_i32_2 = arith.constant 0 : i32
    return %c0_i32, %c0_i32_0, %c0_i32_1 : i32, i32, i32
  }
  func.func @transform_9(%arg0: i32) -> (i32, i32, i32) {
    %c0_i32 = arith.constant 0 : i32
    %c0_i32_0 = arith.constant 0 : i32
    %c0_i32_1 = arith.constant 0 : i32
    %c0_i32_2 = arith.constant 0 : i32
    return %c0_i32, %c0_i32_0, %c0_i32_1 : i32, i32, i32
  }
  func.func @transform_10(%arg0: i32) -> (i32, i32, i32) {
    %c0_i32 = arith.constant 0 : i32
    %c0_i32_0 = arith.constant 0 : i32
    %c0_i32_1 = arith.constant 0 : i32
    %c0_i32_2 = arith.constant 0 : i32
    return %c0_i32, %c0_i32_0, %c0_i32_1 : i32, i32, i32
  }
  func.func @transform_11(%arg0: i32) -> (i32, i32, i32) {
    %c0_i32 = arith.constant 0 : i32
    %c0_i32_0 = arith.constant 0 : i32
    %c0_i32_1 = arith.constant 0 : i32
    %c0_i32_2 = arith.constant 0 : i32
    return %c0_i32, %c0_i32_0, %c0_i32_1 : i32, i32, i32
  }
  func.func @transform_12(%arg0: i32) -> (i32, i32, i32) {
    %c0_i32 = arith.constant 0 : i32
    %c0_i32_0 = arith.constant 0 : i32
    %c0_i32_1 = arith.constant 0 : i32
    %c0_i32_2 = arith.constant 0 : i32
    return %c0_i32, %c0_i32_0, %c0_i32_1 : i32, i32, i32
  }
  func.func @transform_13(%arg0: i32) -> (i32, i32, i32) {
    %c0_i32 = arith.constant 0 : i32
    %c0_i32_0 = arith.constant 0 : i32
    %c0_i32_1 = arith.constant 0 : i32
    %c0_i32_2 = arith.constant 0 : i32
    return %c0_i32, %c0_i32_0, %c0_i32_1 : i32, i32, i32
  }
  func.func @transform_14(%arg0: i32) -> (i32, i32, i32) {
    %c0_i32 = arith.constant 0 : i32
    %c0_i32_0 = arith.constant 0 : i32
    %c0_i32_1 = arith.constant 0 : i32
    %c0_i32_2 = arith.constant 0 : i32
    return %c0_i32, %c0_i32_0, %c0_i32_1 : i32, i32, i32
  }
  func.func @transform_15(%arg0: i32) -> (i32, i32) {
    %c0_i32 = arith.constant 0 : i32
    %c0_i32_0 = arith.constant 0 : i32
    %c0_i32_1 = arith.constant 0 : i32
    return %c0_i32, %c0_i32_0 : i32, i32
  }
  func.func @transform_16(%arg0: i32) -> (i32, i32) {
    %c0_i32 = arith.constant 0 : i32
    %c0_i32_0 = arith.constant 0 : i32
    %c0_i32_1 = arith.constant 0 : i32
    return %c0_i32, %c0_i32_0 : i32, i32
  }
  func.func @transform_17(%arg0: i32) -> (i32, i32) {
    %c0_i32 = arith.constant 0 : i32
    %c0_i32_0 = arith.constant 0 : i32
    %c0_i32_1 = arith.constant 0 : i32
    return %c0_i32, %c0_i32_0 : i32, i32
  }
  func.func @transform_18(%arg0: i32) -> (i32, i32) {
    %c0_i32 = arith.constant 0 : i32
    %c0_i32_0 = arith.constant 0 : i32
    %c0_i32_1 = arith.constant 0 : i32
    return %c0_i32, %c0_i32_0 : i32, i32
  }
  func.func @transform_19(%arg0: i32) -> (i32, i32) {
    %c0_i32 = arith.constant 0 : i32
    %c0_i32_0 = arith.constant 0 : i32
    %c0_i32_1 = arith.constant 0 : i32
    return %c0_i32, %c0_i32_0 : i32, i32
  }
  func.func @transform_20(%arg0: i32) -> (i32, i32) {
    %c0_i32 = arith.constant 0 : i32
    %c0_i32_0 = arith.constant 0 : i32
    %c0_i32_1 = arith.constant 0 : i32
    return %c0_i32, %c0_i32_0 : i32, i32
  }
  func.func @transform_21(%arg0: i32) -> (i32, i32) {
    %c0_i32 = arith.constant 0 : i32
    %c0_i32_0 = arith.constant 0 : i32
    %c0_i32_1 = arith.constant 0 : i32
    return %c0_i32, %c0_i32_0 : i32, i32
  }
}

</mosaic_0001>

<llo_original>
// kernel: tpu_custom_call.1
$region0: #{tpu_custom_call.1}
  #allocation0 [shape = 'u32[]', space=smem, size = 0x4, offset = 0x4, fixed_abs, tag = 'smem constant byte address 0x4 - core index']
  #allocation1 [shape = 'u32[72,128]{1,0:T(1,128)}', space=vmem, size = 0x9000, scoped, tag = 'internal scratch']
  #allocation2 [shape = 'f32[30,16]{1,0:T(8,128)}', space=vmem, size = 0x4000, scoped, tag = 'scratch operand']
  #allocation3 [shape = 'f32[6,16]{1,0:T(8,128)}', space=vmem, size = 0x1000, scoped, tag = 'scratch operand']
  %s0 = inlined_call_operand.vmem [shape: f32[30,16], index: 0, kind: input, shape index: {}]
  %s1 = inlined_call_operand.vmem [shape: f32[6,34], index: 1, kind: input, shape index: {}]
  %s2 = inlined_call_operand.vmem [shape: f32[6,1], index: 2, kind: input, shape index: {}]
  %s3 = inlined_call_operand.vmem [shape: f32[1,1,16], index: 3, kind: input, shape index: {}]
  %s4 = inlined_call_operand.vmem [shape: f32[1,1,16], index: 4, kind: input, shape index: {}]
  %s5 = inlined_call_operand.vmem [shape: f32[1,16,48], index: 5, kind: input, shape index: {}]
  %s6 = inlined_call_operand.vmem [shape: f32[1,1,48], index: 6, kind: input, shape index: {}]
  %s7 = inlined_call_operand.vmem [shape: f32[1,16,16], index: 7, kind: input, shape index: {}]
  %s8 = inlined_call_operand.vmem [shape: f32[1,1,16], index: 8, kind: input, shape index: {}]
  %s9 = inlined_call_operand.vmem [shape: f32[1,1,16], index: 9, kind: input, shape index: {}]
  %s10 = inlined_call_operand.vmem [shape: f32[1,1,16], index: 10, kind: input, shape index: {}]
  %s11 = inlined_call_operand.vmem [shape: f32[1,16,32], index: 11, kind: input, shape index: {}]
  %s12 = inlined_call_operand.vmem [shape: f32[1,1,32], index: 12, kind: input, shape index: {}]
  %s13 = inlined_call_operand.vmem [shape: f32[1,32,16], index: 13, kind: input, shape index: {}]
  %s14 = inlined_call_operand.vmem [shape: f32[1,1,16], index: 14, kind: input, shape index: {}]
  %s15 = inlined_call_operand.vmem [shape: f32[16,32], index: 15, kind: input, shape index: {}]
  %s16 = inlined_call_operand.vmem [shape: f32[1,32], index: 16, kind: input, shape index: {}]
  %s17 = inlined_call_operand.vmem [shape: f32[34,32], index: 17, kind: input, shape index: {}]
  %s18 = inlined_call_operand.vmem [shape: f32[1,32], index: 18, kind: input, shape index: {}]
  %s19 = inlined_call_operand.vmem [shape: f32[32,32], index: 19, kind: input, shape index: {}]
  %s20 = inlined_call_operand.vmem [shape: f32[1,32], index: 20, kind: input, shape index: {}]
  %s21 = inlined_call_operand.hbm [shape: f32[6,32], index: 21, kind: output, shape index: {}]
  %s22 = sld [smem:[#allocation0]]
  $region94: #{tpu_custom_call.1} parent=0
    _
  %s24 = ssub.s32 1, %s22
  %s25 = scalar_select 0, %s24, %s22
  $region1: #{tpu_custom_call.1} parent=0
    #allocation4 [shape = 'u8[4096]{0}', space=vmem, size = 0x1000, scoped, tag = 'output window, operand 0, single buffered']
    #allocation5 [shape = 's32[1]{0}', space=sflag, size = 0x4, scoped, tag = 'scoped memory for tpu_custom_call.1']
    %26 = vsyncpa [#allocation5], 0
    // Predicated region
    $region2: #{tpu_custom_call.1} parent=1 // pred_check
      _
    $region3: #{tpu_custom_call.1} parent=1 // pred_check_branch
      %28 = sbr.rel (0) target = $region5
    $region4: #{tpu_custom_call.1} parent=1 // pred_region
      _
    $region5: #{tpu_custom_call.1} parent=1 // pred_fallthru
      _
    // Predicated region
    $region6: #{tpu_custom_call.1} parent=1 // pred_check
      _
    $region7: #{tpu_custom_call.1} parent=1 // pred_check_branch
      %30 = sbr.rel (0) target = $region9
    $region8: #{tpu_custom_call.1} parent=1 // pred_region
      _
    $region9: #{tpu_custom_call.1} parent=1 // pred_fallthru
      _
    // Predicated region
    $region10: #{tpu_custom_call.1} parent=1 // pred_check
      _
    $region11: #{tpu_custom_call.1} parent=1 // pred_check_branch
      %32 = sbr.rel (0) target = $region13
    $region12: #{tpu_custom_call.1} parent=1 // pred_region
      _
    $region13: #{tpu_custom_call.1} parent=1 // pred_fallthru
      _
    // Predicated region
    $region14: #{tpu_custom_call.1} parent=1 // pred_check
      _
    $region15: #{tpu_custom_call.1} parent=1 // pred_check_branch
      %34 = sbr.rel (0) target = $region17
    $region16: #{tpu_custom_call.1} parent=1 // pred_region
      _
    $region17: #{tpu_custom_call.1} parent=1 // pred_fallthru
      _
    // Predicated region
    $region18: #{tpu_custom_call.1} parent=1 // pred_check
      _
    $region19: #{tpu_custom_call.1} parent=1 // pred_check_branch
      %36 = sbr.rel (0) target = $region21
    $region20: #{tpu_custom_call.1} parent=1 // pred_region
      _
    $region21: #{tpu_custom_call.1} parent=1 // pred_fallthru
      _
    // Predicated region
    $region22: #{tpu_custom_call.1} parent=1 // pred_check
      _
    $region23: #{tpu_custom_call.1} parent=1 // pred_check_branch
      %38 = sbr.rel (0) target = $region25
    $region24: #{tpu_custom_call.1} parent=1 // pred_region
      _
    $region25: #{tpu_custom_call.1} parent=1 // pred_fallthru
      _
    // Predicated region
    $region26: #{tpu_custom_call.1} parent=1 // pred_check
      _
    $region27: #{tpu_custom_call.1} parent=1 // pred_check_branch
      %40 = sbr.rel (0) target = $region29
    $region28: #{tpu_custom_call.1} parent=1 // pred_region
      _
    $region29: #{tpu_custom_call.1} parent=1 // pred_fallthru
      _
    // Predicated region
    $region30: #{tpu_custom_call.1} parent=1 // pred_check
      _
    $region31: #{tpu_custom_call.1} parent=1 // pred_check_branch
      %42 = sbr.rel (0) target = $region33
    $region32: #{tpu_custom_call.1} parent=1 // pred_region
      _
    $region33: #{tpu_custom_call.1} parent=1 // pred_fallthru
      _
    // Predicated region
    $region34: #{tpu_custom_call.1} parent=1 // pred_check
      _
    $region35: #{tpu_custom_call.1} parent=1 // pred_check_branch
      %44 = sbr.rel (0) target = $region37
    $region36: #{tpu_custom_call.1} parent=1 // pred_region
      _
    $region37: #{tpu_custom_call.1} parent=1 // pred_fallthru
      _
    // Predicated region
    $region38: #{tpu_custom_call.1} parent=1 // pred_check
      _
    $region39: #{tpu_custom_call.1} parent=1 // pred_check_branch
      %46 = sbr.rel (0) target = $region41
    $region40: #{tpu_custom_call.1} parent=1 // pred_region
      _
    $region41: #{tpu_custom_call.1} parent=1 // pred_fallthru
      _
    // Predicated region
    $region42: #{tpu_custom_call.1} parent=1 // pred_check
      _
    $region43: #{tpu_custom_call.1} parent=1 // pred_check_branch
      %48 = sbr.rel (0) target = $region45
    $region44: #{tpu_custom_call.1} parent=1 // pred_region
      _
    $region45: #{tpu_custom_call.1} parent=1 // pred_fallthru
      _
    // Predicated region
    $region46: #{tpu_custom_call.1} parent=1 // pred_check
      _
    $region47: #{tpu_custom_call.1} parent=1 // pred_check_branch
      %50 = sbr.rel (0) target = $region49
    $region48: #{tpu_custom_call.1} parent=1 // pred_region
      _
    $region49: #{tpu_custom_call.1} parent=1 // pred_fallthru
      _
    // Predicated region
    $region50: #{tpu_custom_call.1} parent=1 // pred_check
      _
    $region51: #{tpu_custom_call.1} parent=1 // pred_check_branch
      %52 = sbr.rel (0) target = $region53
    $region52: #{tpu_custom_call.1} parent=1 // pred_region
      _
    $region53: #{tpu_custom_call.1} parent=1 // pred_fallthru
      _
    // Predicated region
    $region54: #{tpu_custom_call.1} parent=1 // pred_check
      _
    $region55: #{tpu_custom_call.1} parent=1 // pred_check_branch
      %54 = sbr.rel (0) target = $region57
    $region56: #{tpu_custom_call.1} parent=1 // pred_region
      _
    $region57: #{tpu_custom_call.1} parent=1 // pred_fallthru
      _
    // Predicated region
    $region58: #{tpu_custom_call.1} parent=1 // pred_check
      _
    $region59: #{tpu_custom_call.1} parent=1 // pred_check_branch
      %56 = sbr.rel (0) target = $region61
    $region60: #{tpu_custom_call.1} parent=1 // pred_region
      _
    $region61: #{tpu_custom_call.1} parent=1 // pred_fallthru
      _
    // Predicated region
    $region62: #{tpu_custom_call.1} parent=1 // pred_check
      _
    $region63: #{tpu_custom_call.1} parent=1 // pred_check_branch
      %58 = sbr.rel (0) target = $region65
    $region64: #{tpu_custom_call.1} parent=1 // pred_region
      _
    $region65: #{tpu_custom_call.1} parent=1 // pred_fallthru
      _
    // Predicated region
    $region66: #{tpu_custom_call.1} parent=1 // pred_check
      _
    $region67: #{tpu_custom_call.1} parent=1 // pred_check_branch
      %60 = sbr.rel (0) target = $region69
    $region68: #{tpu_custom_call.1} parent=1 // pred_region
      _
    $region69: #{tpu_custom_call.1} parent=1 // pred_fallthru
      _
    // Predicated region
    $region70: #{tpu_custom_call.1} parent=1 // pred_check
      _
    $region71: #{tpu_custom_call.1} parent=1 // pred_check_branch
      %62 = sbr.rel (0) target = $region73
    $region72: #{tpu_custom_call.1} parent=1 // pred_region
      _
    $region73: #{tpu_custom_call.1} parent=1 // pred_fallthru
      _
    // Predicated region
    $region74: #{tpu_custom_call.1} parent=1 // pred_check
      _
    $region75: #{tpu_custom_call.1} parent=1 // pred_check_branch
      %64 = sbr.rel (0) target = $region77
    $region76: #{tpu_custom_call.1} parent=1 // pred_region
      _
    $region77: #{tpu_custom_call.1} parent=1 // pred_fallthru
      _
    // Predicated region
    $region78: #{tpu_custom_call.1} parent=1 // pred_check
      _
    $region79: #{tpu_custom_call.1} parent=1 // pred_check_branch
      %66 = sbr.rel (0) target = $region81
    $region80: #{tpu_custom_call.1} parent=1 // pred_region
      _
    $region81: #{tpu_custom_call.1} parent=1 // pred_fallthru
      _
    // Predicated region
    $region82: #{tpu_custom_call.1} parent=1 // pred_check
      _
    $region83: #{tpu_custom_call.1} parent=1 // pred_check_branch
      %68 = sbr.rel (0) target = $region85
    $region84: #{tpu_custom_call.1} parent=1 // pred_region
      _
    $region85: #{tpu_custom_call.1} parent=1 // pred_fallthru
      _
    %v69 = vld [vmem:[%s0] sm:$0xff]
    %v70 = vld [vmem:[%s0 + $0x8] sm:$0xff]
    %v71 = vld [vmem:[%s0 + $0x10] sm:$0xff]
    %v72 = vld [vmem:[%s0 + $0x18] sm:$0x3f]
    %v73 = vld [vmem:[%s5] sm:$0xff]
    %v74 = vld [vmem:[%s5 + $0x8] sm:$0xff]
    %v75 = vld [vmem:[%s6] sm:$0x1]
    %v77 = vperm.slane %v75, 0
    %vm79 = vcmask 130048
    %v81 = vsel %vm79, %v69, 0
    %v84 = vsel %vm79, %v70, 0
    %v87 = vsel %vm79, %v71, 0
    %v90 = vsel %vm79, %v72, 0
    %92 = vmatpush.msra.mxu0 0.0
    %93 = vmatpush.msra.mxu0 0.0
    %94 = vmatpush.msra.mxu0 0.0
    %95 = vmatpush.msra.mxu0 0.0
    %96 = vmatpush.msra.mxu0 0.0
    %97 = vmatpush.msra.mxu0 0.0
    %98 = vmatpush.msra.mxu0 0.0
    %99 = vmatpush.msra.mxu0 0.0
    %100 = vmatpush.msra.mxu0 0.0
    %101 = vmatpush.msra.mxu0 0.0
    %102 = vmatpush.msra.mxu0 0.0
    %103 = vmatpush.msra.mxu0 0.0
    %104 = vmatpush.msra.mxu0 0.0
    %105 = vmatpush.msra.mxu0 0.0
    %106 = vmatpush.msra.mxu0 %v74
    %107 = vmatpush.msra.mxu0 %v73
    %108 = vmatmul.f32.gmra.mxu0 %v81
    %v109 = vpop.f32.mrf.mxu0
    %v110 = vadd.f32 %v77, %v109
    %111 = vmatmul.f32.gmra.mxu0 %v84
    %v112 = vpop.f32.mrf.mxu0
    %v113 = vadd.f32 %v77, %v112
    %114 = vmatmul.f32.gmra.mxu0 %v87
    %v115 = vpop.f32.mrf.mxu0
    %v116 = vadd.f32 %v77, %v115
    %117 = vmatmul.f32.gmra.mxu0 %v90
    %v118 = vpop.f32.mrf.mxu0
    %v119 = vadd.f32 %v77, %v118
    %120 = vdwg.mxu0
    %v121 = vld [vmem:[%s7] sm:$0xff]
    %v122 = vld [vmem:[%s7 + $0x8] sm:$0xff]
    %124 = vrot.lane.b32.xlu0 %v110, 112
    %v125 = vpop.permute.xlu0 %124
    %vm126 = vcmask 64512
    %v127 = vsel %vm126, %v110, 0
    %v129 = vsel %vm126, %v125, 0
    %131 = vmatpush.xpose.msra.mxu0 0.0
    %132 = vmatpush.xpose.msra.mxu0 0.0
    %133 = vmatpush.xpose.msra.mxu0 0.0
    %134 = vmatpush.xpose.msra.mxu0 0.0
    %135 = vmatpush.xpose.msra.mxu0 0.0
    %136 = vmatpush.xpose.msra.mxu0 0.0
    %137 = vmatpush.xpose.msra.mxu0 0.0
    %138 = vmatpush.xpose.msra.mxu0 0.0
    %139 = vmatpush.xpose.msra.mxu0 0.0
    %140 = vmatpush.xpose.msra.mxu0 0.0
    %141 = vmatpush.xpose.msra.mxu0 0.0
    %142 = vmatpush.xpose.msra.mxu0 0.0
    %143 = vmatpush.xpose.msra.mxu0 0.0
    %144 = vmatpush.xpose.msra.mxu0 0.0
    %145 = vmatpush.xpose.msra.mxu0 0.0
    %146 = vmatpush.xpose.msra.mxu0 %v129
    %147 = vmatmul.f32.gmra.mxu0 %v127
    %v148 = vpop.f32.mrf.mxu0
    %v149 = vadd.f32 0.0, %v148
    %150 = vdwg.mxu0
    %vm151 = vcmask 36864
    %v152 = vsel %vm151, %v149, -inf
    %153 = vmax.xlane.f32.xlu0 %v152
    %v154 = vpop.xlane.xlu0 %153
    %v155 = vsub.f32 %v149, %v154
    %v156 = vmul.f32 %v155, 1.442695
    %v157 = vpow.pop %v156
    %v158 = vsel %vm151, %v157, 0.0
    %159 = vadd.xlane.f32.xlu0 %v158
    %v160 = vpop.xlane.xlu0 %159
    %v161 = vrcp.pop %v160
    %v162 = vmul.f32 %v157, %v161
    %163 = vrot.lane.b32.xlu0 %v110, 96
    %v164 = vpop.permute.xlu0 %163
    %vm165 = vcmask 39936
    %v167 = vsel %vm165, %v162, 0
    %vm169 = vcmask 1044480
    %v170 = vsel %vm169, %v164, 0
    %172 = vmatpush.msra.mxu0 0.0
    %173 = vmatpush.msra.mxu0 0.0
    %174 = vmatpush.msra.mxu0 0.0
    %175 = vmatpush.msra.mxu0 0.0
    %176 = vmatpush.msra.mxu0 0.0
    %177 = vmatpush.msra.mxu0 0.0
    %178 = vmatpush.msra.mxu0 0.0
    %179 = vmatpush.msra.mxu0 0.0
    %180 = vmatpush.msra.mxu0 0.0
    %181 = vmatpush.msra.mxu0 0.0
    %182 = vmatpush.msra.mxu0 0.0
    %183 = vmatpush.msra.mxu0 0.0
    %184 = vmatpush.msra.mxu0 0.0
    %185 = vmatpush.msra.mxu0 0.0
    %186 = vmatpush.msra.mxu0 0.0
    %187 = vmatpush.msra.mxu0 %v170
    %188 = vmatmul.f32.gmra.mxu0 %v167
    %v189 = vpop.f32.mrf.mxu0
    %v190 = vadd.f32 0.0, %v189
    %191 = vdwg.mxu0
    %192 = vrot.lane.b32.xlu0 %v110, 120
    %v193 = vpop.permute.xlu0 %192
    %194 = vrot.lane.b32.xlu0 %v110, 104
    %v195 = vpop.permute.xlu0 %194
    %v196 = vsel %vm126, %v193, 0
    %v198 = vsel %vm126, %v195, 0
    %200 = vmatpush.xpose.msra.mxu0 0.0
    %201 = vmatpush.xpose.msra.mxu0 0.0
    %202 = vmatpush.xpose.msra.mxu0 0.0
    %203 = vmatpush.xpose.msra.mxu0 0.0
    %204 = vmatpush.xpose.msra.mxu0 0.0
    %205 = vmatpush.xpose.msra.mxu0 0.0
    %206 = vmatpush.xpose.msra.mxu0 0.0
    %207 = vmatpush.xpose.msra.mxu0 0.0
    %208 = vmatpush.xpose.msra.mxu0 0.0
    %209 = vmatpush.xpose.msra.mxu0 0.0
    %210 = vmatpush.xpose.msra.mxu0 0.0
    %211 = vmatpush.xpose.msra.mxu0 0.0
    %212 = vmatpush.xpose.msra.mxu0 0.0
    %213 = vmatpush.xpose.msra.mxu0 0.0
    %214 = vmatpush.xpose.msra.mxu0 0.0
    %215 = vmatpush.xpose.msra.mxu0 %v198
    %216 = vmatmul.f32.gmra.mxu0 %v196
    %v217 = vpop.f32.mrf.mxu0
    %v218 = vadd.f32 0.0, %v217
    %219 = vdwg.mxu0
    %v220 = vsel %vm151, %v218, -inf
    %221 = vmax.xlane.f32.xlu0 %v220
    %v222 = vpop.xlane.xlu0 %221
    %v223 = vsub.f32 %v218, %v222
    %v224 = vmul.f32 %v223, 1.442695
    %v225 = vpow.pop %v224
    %v226 = vsel %vm151, %v225, 0.0
    %227 = vadd.xlane.f32.xlu0 %v226
    %v228 = vpop.xlane.xlu0 %227
    %v229 = vrcp.pop %v228
    %v230 = vmul.f32 %v225, %v229
    %231 = vrot.lane.b32.xlu0 %v110, 88
    %v232 = vpop.permute.xlu0 %231
    %v234 = vsel %vm165, %v230, 0
    %v236 = vsel %vm169, %v232, 0
    %238 = vmatpush.msra.mxu0 0.0
    %239 = vmatpush.msra.mxu0 0.0
    %240 = vmatpush.msra.mxu0 0.0
    %241 = vmatpush.msra.mxu0 0.0
    %242 = vmatpush.msra.mxu0 0.0
    %243 = vmatpush.msra.mxu0 0.0
    %244 = vmatpush.msra.mxu0 0.0
    %245 = vmatpush.msra.mxu0 0.0
    %246 = vmatpush.msra.mxu0 0.0
    %247 = vmatpush.msra.mxu0 0.0
    %248 = vmatpush.msra.mxu0 0.0
    %249 = vmatpush.msra.mxu0 0.0
    %250 = vmatpush.msra.mxu0 0.0
    %251 = vmatpush.msra.mxu0 0.0
    %252 = vmatpush.msra.mxu0 0.0
    %253 = vmatpush.msra.mxu0 %v236
    %254 = vmatmul.f32.gmra.mxu0 %v234
    %v255 = vpop.f32.mrf.mxu0
    %v256 = vadd.f32 0.0, %v255
    %257 = vdwg.mxu0
    %v259 = vsel %vm126, %v256, 0
    %261 = vmatpush.msra.mxu0 0.0
    %262 = vmatpush.msra.mxu0 0.0
    %263 = vmatpush.msra.mxu0 0.0
    %264 = vmatpush.msra.mxu0 0.0
    %265 = vmatpush.msra.mxu0 0.0
    %266 = vmatpush.msra.mxu0 0.0
    %267 = vmatpush.msra.mxu0 0.0
    %268 = vmatpush.msra.mxu0 0.0
    %269 = vmatpush.msra.mxu0 0.0
    %270 = vmatpush.msra.mxu0 0.0
    %271 = vmatpush.msra.mxu0 0.0
    %272 = vmatpush.msra.mxu0 0.0
    %273 = vmatpush.msra.mxu0 0.0
    %274 = vmatpush.msra.mxu0 0.0
    %275 = vmatpush.msra.mxu0 0.0
    %276 = vmatpush.msra.mxu0 %v122
    %277 = vmatmul.f32.gmra.mxu0 %v259
    %v278 = vpop.f32.mrf.mxu0
    %v279 = vadd.f32 0.0, %v278
    %280 = vdwg.mxu0
    %v282 = vsel %vm126, %v190, 0
    %284 = vmatpush.msra.mxu0 0.0
    %285 = vmatpush.msra.mxu0 0.0
    %286 = vmatpush.msra.mxu0 0.0
    %287 = vmatpush.msra.mxu0 0.0
    %288 = vmatpush.msra.mxu0 0.0
    %289 = vmatpush.msra.mxu0 0.0
    %290 = vmatpush.msra.mxu0 0.0
    %291 = vmatpush.msra.mxu0 0.0
    %292 = vmatpush.msra.mxu0 0.0
    %293 = vmatpush.msra.mxu0 0.0
    %294 = vmatpush.msra.mxu0 0.0
    %295 = vmatpush.msra.mxu0 0.0
    %296 = vmatpush.msra.mxu0 0.0
    %297 = vmatpush.msra.mxu0 0.0
    %298 = vmatpush.msra.mxu0 0.0
    %299 = vmatpush.msra.mxu0 %v121
    %300 = vmatmul.f32.gmra.mxu0 %v282
    %v301 = vpop.f32.mrf.mxu0
    %v302 = vadd.f32 %v279, %v301
    %303 = vdwg.mxu0
    %vm304 = vcmask 126976
    %305 = vst.msk [vmem:[#allocation2] sm:$0x1f] %vm304, %v302
    %vm307 = vcmask 1042432
    %v308 = vrot.slane %v110, 5
    %v309 = vrot.slane %v113, 5
    %v310 = vsel %vm307, %v308, %v309
    %311 = vrot.lane.b32.xlu0 %v310, 112
    %v312 = vpop.permute.xlu0 %311
    %v313 = vsel %vm126, %v310, 0
    %v315 = vsel %vm126, %v312, 0
    %317 = vmatpush.xpose.msra.mxu0 0.0
    %318 = vmatpush.xpose.msra.mxu0 0.0
    %319 = vmatpush.xpose.msra.mxu0 0.0
    %320 = vmatpush.xpose.msra.mxu0 0.0
    %321 = vmatpush.xpose.msra.mxu0 0.0
    %322 = vmatpush.xpose.msra.mxu0 0.0
    %323 = vmatpush.xpose.msra.mxu0 0.0
    %324 = vmatpush.xpose.msra.mxu0 0.0
    %325 = vmatpush.xpose.msra.mxu0 0.0
    %326 = vmatpush.xpose.msra.mxu0 0.0
    %327 = vmatpush.xpose.msra.mxu0 0.0
    %328 = vmatpush.xpose.msra.mxu0 0.0
    %329 = vmatpush.xpose.msra.mxu0 0.0
    %330 = vmatpush.xpose.msra.mxu0 0.0
    %331 = vmatpush.xpose.msra.mxu0 0.0
    %332 = vmatpush.xpose.msra.mxu0 %v315
    %333 = vmatmul.f32.gmra.mxu0 %v313
    %v334 = vpop.f32.mrf.mxu0
    %v335 = vadd.f32 0.0, %v334
    %336 = vdwg.mxu0
    %v337 = vsel %vm151, %v335, -inf
    %338 = vmax.xlane.f32.xlu0 %v337
    %v339 = vpop.xlane.xlu0 %338
    %v340 = vsub.f32 %v335, %v339
    %v341 = vmul.f32 %v340, 1.442695
    %v342 = vpow.pop %v341
    %v343 = vsel %vm151, %v342, 0.0
    %344 = vadd.xlane.f32.xlu0 %v343
    %v345 = vpop.xlane.xlu0 %344
    %v346 = vrcp.pop %v345
    %v347 = vmul.f32 %v342, %v346
    %348 = vrot.lane.b32.xlu0 %v310, 96
    %v349 = vpop.permute.xlu0 %348
    %v351 = vsel %vm165, %v347, 0
    %v353 = vsel %vm169, %v349, 0
    %355 = vmatpush.msra.mxu0 0.0
    %356 = vmatpush.msra.mxu0 0.0
    %357 = vmatpush.msra.mxu0 0.0
    %358 = vmatpush.msra.mxu0 0.0
    %359 = vmatpush.msra.mxu0 0.0
    %360 = vmatpush.msra.mxu0 0.0
    %361 = vmatpush.msra.mxu0 0.0
    %362 = vmatpush.msra.mxu0 0.0
    %363 = vmatpush.msra.mxu0 0.0
    %364 = vmatpush.msra.mxu0 0.0
    %365 = vmatpush.msra.mxu0 0.0
    %366 = vmatpush.msra.mxu0 0.0
    %367 = vmatpush.msra.mxu0 0.0
    %368 = vmatpush.msra.mxu0 0.0
    %369 = vmatpush.msra.mxu0 0.0
    %370 = vmatpush.msra.mxu0 %v353
    %371 = vmatmul.f32.gmra.mxu0 %v351
    %v372 = vpop.f32.mrf.mxu0
    %v373 = vadd.f32 0.0, %v372
    %374 = vdwg.mxu0
    %375 = vrot.lane.b32.xlu0 %v310, 120
    %v376 = vpop.permute.xlu0 %375
    %377 = vrot.lane.b32.xlu0 %v310, 104
    %v378 = vpop.permute.xlu0 %377
    %v379 = vsel %vm126, %v376, 0
    %v381 = vsel %vm126, %v378, 0
    %383 = vmatpush.xpose.msra.mxu0 0.0
    %384 = vmatpush.xpose.msra.mxu0 0.0
    %385 = vmatpush.xpose.msra.mxu0 0.0
    %386 = vmatpush.xpose.msra.mxu0 0.0
    %387 = vmatpush.xpose.msra.mxu0 0.0
    %388 = vmatpush.xpose.msra.mxu0 0.0
    %389 = vmatpush.xpose.msra.mxu0 0.0
    %390 = vmatpush.xpose.msra.mxu0 0.0
    %391 = vmatpush.xpose.msra.mxu0 0.0
    %392 = vmatpush.xpose.msra.mxu0 0.0
    %393 = vmatpush.xpose.msra.mxu0 0.0
    %394 = vmatpush.xpose.msra.mxu0 0.0
    %395 = vmatpush.xpose.msra.mxu0 0.0
    %396 = vmatpush.xpose.msra.mxu0 0.0
    %397 = vmatpush.xpose.msra.mxu0 0.0
    %398 = vmatpush.xpose.msra.mxu0 %v381
    %399 = vmatmul.f32.gmra.mxu0 %v379
    %v400 = vpop.f32.mrf.mxu0
    %v401 = vadd.f32 0.0, %v400
    %402 = vdwg.mxu0
    %v403 = vsel %vm151, %v401, -inf
    %404 = vmax.xlane.f32.xlu0 %v403
    %v405 = vpop.xlane.xlu0 %404
    %v406 = vsub.f32 %v401, %v405
    %v407 = vmul.f32 %v406, 1.442695
    %v408 = vpow.pop %v407
    %v409 = vsel %vm151, %v408, 0.0
    %410 = vadd.xlane.f32.xlu0 %v409
    %v411 = vpop.xlane.xlu0 %410
    %v412 = vrcp.pop %v411
    %v413 = vmul.f32 %v408, %v412
    %414 = vrot.lane.b32.xlu0 %v310, 88
    %v415 = vpop.permute.xlu0 %414
    %v417 = vsel %vm165, %v413, 0
    %v419 = vsel %vm169, %v415, 0
    %421 = vmatpush.msra.mxu0 0.0
    %422 = vmatpush.msra.mxu0 0.0
    %423 = vmatpush.msra.mxu0 0.0
    %424 = vmatpush.msra.mxu0 0.0
    %425 = vmatpush.msra.mxu0 0.0
    %426 = vmatpush.msra.mxu0 0.0
    %427 = vmatpush.msra.mxu0 0.0
    %428 = vmatpush.msra.mxu0 0.0
    %429 = vmatpush.msra.mxu0 0.0
    %430 = vmatpush.msra.mxu0 0.0
    %431 = vmatpush.msra.mxu0 0.0
    %432 = vmatpush.msra.mxu0 0.0
    %433 = vmatpush.msra.mxu0 0.0
    %434 = vmatpush.msra.mxu0 0.0
    %435 = vmatpush.msra.mxu0 0.0
    %436 = vmatpush.msra.mxu0 %v419
    %437 = vmatmul.f32.gmra.mxu0 %v417
    %v438 = vpop.f32.mrf.mxu0
    %v439 = vadd.f32 0.0, %v438
    %440 = vdwg.mxu0
    %v442 = vsel %vm126, %v439, 0
    %444 = vmatpush.msra.mxu0 0.0
    %445 = vmatpush.msra.mxu0 0.0
    %446 = vmatpush.msra.mxu0 0.0
    %447 = vmatpush.msra.mxu0 0.0
    %448 = vmatpush.msra.mxu0 0.0
    %449 = vmatpush.msra.mxu0 0.0
    %450 = vmatpush.msra.mxu0 0.0
    %451 = vmatpush.msra.mxu0 0.0
    %452 = vmatpush.msra.mxu0 0.0
    %453 = vmatpush.msra.mxu0 0.0
    %454 = vmatpush.msra.mxu0 0.0
    %455 = vmatpush.msra.mxu0 0.0
    %456 = vmatpush.msra.mxu0 0.0
    %457 = vmatpush.msra.mxu0 0.0
    %458 = vmatpush.msra.mxu0 0.0
    %459 = vmatpush.msra.mxu0 %v122
    %460 = vmatmul.f32.gmra.mxu0 %v442
    %v461 = vpop.f32.mrf.mxu0
    %v462 = vadd.f32 0.0, %v461
    %463 = vdwg.mxu0
    %v465 = vsel %vm126, %v373, 0
    %467 = vmatpush.msra.mxu0 0.0
    %468 = vmatpush.msra.mxu0 0.0
    %469 = vmatpush.msra.mxu0 0.0
    %470 = vmatpush.msra.mxu0 0.0
    %471 = vmatpush.msra.mxu0 0.0
    %472 = vmatpush.msra.mxu0 0.0
    %473 = vmatpush.msra.mxu0 0.0
    %474 = vmatpush.msra.mxu0 0.0
    %475 = vmatpush.msra.mxu0 0.0
    %476 = vmatpush.msra.mxu0 0.0
    %477 = vmatpush.msra.mxu0 0.0
    %478 = vmatpush.msra.mxu0 0.0
    %479 = vmatpush.msra.mxu0 0.0
    %480 = vmatpush.msra.mxu0 0.0
    %481 = vmatpush.msra.mxu0 0.0
    %482 = vmatpush.msra.mxu0 %v121
    %483 = vmatmul.f32.gmra.mxu0 %v465
    %v484 = vpop.f32.mrf.mxu0
    %v485 = vadd.f32 %v462, %v484
    %486 = vdwg.mxu0
    %487 = vst.msk [vmem:[#allocation2 + $0x5] sm:$0x1f] %vm304, %v485
    %v488 = vrot.slane %v113, 2
    %489 = vrot.lane.b32.xlu0 %v488, 112
    %v490 = vpop.permute.xlu0 %489
    %v491 = vsel %vm126, %v488, 0
    %v493 = vsel %vm126, %v490, 0
    %495 = vmatpush.xpose.msra.mxu0 0.0
    %496 = vmatpush.xpose.msra.mxu0 0.0
    %497 = vmatpush.xpose.msra.mxu0 0.0
    %498 = vmatpush.xpose.msra.mxu0 0.0
    %499 = vmatpush.xpose.msra.mxu0 0.0
    %500 = vmatpush.xpose.msra.mxu0 0.0
    %501 = vmatpush.xpose.msra.mxu0 0.0
    %502 = vmatpush.xpose.msra.mxu0 0.0
    %503 = vmatpush.xpose.msra.mxu0 0.0
    %504 = vmatpush.xpose.msra.mxu0 0.0
    %505 = vmatpush.xpose.msra.mxu0 0.0
    %506 = vmatpush.xpose.msra.mxu0 0.0
    %507 = vmatpush.xpose.msra.mxu0 0.0
    %508 = vmatpush.xpose.msra.mxu0 0.0
    %509 = vmatpush.xpose.msra.mxu0 0.0
    %510 = vmatpush.xpose.msra.mxu0 %v493
    %511 = vmatmul.f32.gmra.mxu0 %v491
    %v512 = vpop.f32.mrf.mxu0
    %v513 = vadd.f32 0.0, %v512
    %514 = vdwg.mxu0
    %v515 = vsel %vm151, %v513, -inf
    %516 = vmax.xlane.f32.xlu0 %v515
    %v517 = vpop.xlane.xlu0 %516
    %v518 = vsub.f32 %v513, %v517
    %v519 = vmul.f32 %v518, 1.442695
    %v520 = vpow.pop %v519
    %v521 = vsel %vm151, %v520, 0.0
    %522 = vadd.xlane.f32.xlu0 %v521
    %v523 = vpop.xlane.xlu0 %522
    %v524 = vrcp.pop %v523
    %v525 = vmul.f32 %v520, %v524
    %526 = vrot.lane.b32.xlu0 %v488, 96
    %v527 = vpop.permute.xlu0 %526
    %v529 = vsel %vm165, %v525, 0
    %v531 = vsel %vm169, %v527, 0
    %533 = vmatpush.msra.mxu0 0.0
    %534 = vmatpush.msra.mxu0 0.0
    %535 = vmatpush.msra.mxu0 0.0
    %536 = vmatpush.msra.mxu0 0.0
    %537 = vmatpush.msra.mxu0 0.0
    %538 = vmatpush.msra.mxu0 0.0
    %539 = vmatpush.msra.mxu0 0.0
    %540 = vmatpush.msra.mxu0 0.0
    %541 = vmatpush.msra.mxu0 0.0
    %542 = vmatpush.msra.mxu0 0.0
    %543 = vmatpush.msra.mxu0 0.0
    %544 = vmatpush.msra.mxu0 0.0
    %545 = vmatpush.msra.mxu0 0.0
    %546 = vmatpush.msra.mxu0 0.0
    %547 = vmatpush.msra.mxu0 0.0
    %548 = vmatpush.msra.mxu0 %v531
    %549 = vmatmul.f32.gmra.mxu0 %v529
    %v550 = vpop.f32.mrf.mxu0
    %v551 = vadd.f32 0.0, %v550
    %552 = vdwg.mxu0
    %553 = vrot.lane.b32.xlu0 %v488, 120
    %v554 = vpop.permute.xlu0 %553
    %555 = vrot.lane.b32.xlu0 %v488, 104
    %v556 = vpop.permute.xlu0 %555
    %v557 = vsel %vm126, %v554, 0
    %v559 = vsel %vm126, %v556, 0
    %561 = vmatpush.xpose.msra.mxu0 0.0
    %562 = vmatpush.xpose.msra.mxu0 0.0
    %563 = vmatpush.xpose.msra.mxu0 0.0
    %564 = vmatpush.xpose.msra.mxu0 0.0
    %565 = vmatpush.xpose.msra.mxu0 0.0
    %566 = vmatpush.xpose.msra.mxu0 0.0
    %567 = vmatpush.xpose.msra.mxu0 0.0
    %568 = vmatpush.xpose.msra.mxu0 0.0
    %569 = vmatpush.xpose.msra.mxu0 0.0
    %570 = vmatpush.xpose.msra.mxu0 0.0
    %571 = vmatpush.xpose.msra.mxu0 0.0
    %572 = vmatpush.xpose.msra.mxu0 0.0
    %573 = vmatpush.xpose.msra.mxu0 0.0
    %574 = vmatpush.xpose.msra.mxu0 0.0
    %575 = vmatpush.xpose.msra.mxu0 0.0
    %576 = vmatpush.xpose.msra.mxu0 %v559
    %577 = vmatmul.f32.gmra.mxu0 %v557
    %v578 = vpop.f32.mrf.mxu0
    %v579 = vadd.f32 0.0, %v578
    %580 = vdwg.mxu0
    %v581 = vsel %vm151, %v579, -inf
    %582 = vmax.xlane.f32.xlu0 %v581
    %v583 = vpop.xlane.xlu0 %582
    %v584 = vsub.f32 %v579, %v583
    %v585 = vmul.f32 %v584, 1.442695
    %v586 = vpow.pop %v585
    %v587 = vsel %vm151, %v586, 0.0
    %588 = vadd.xlane.f32.xlu0 %v587
    %v589 = vpop.xlane.xlu0 %588
    %v590 = vrcp.pop %v589
    %v591 = vmul.f32 %v586, %v590
    %592 = vrot.lane.b32.xlu0 %v488, 88
    %v593 = vpop.permute.xlu0 %592
    %v595 = vsel %vm165, %v591, 0
    %v597 = vsel %vm169, %v593, 0
    %599 = vmatpush.msra.mxu0 0.0
    %600 = vmatpush.msra.mxu0 0.0
    %601 = vmatpush.msra.mxu0 0.0
    %602 = vmatpush.msra.mxu0 0.0
    %603 = vmatpush.msra.mxu0 0.0
    %604 = vmatpush.msra.mxu0 0.0
    %605 = vmatpush.msra.mxu0 0.0
    %606 = vmatpush.msra.mxu0 0.0
    %607 = vmatpush.msra.mxu0 0.0
    %608 = vmatpush.msra.mxu0 0.0
    %609 = vmatpush.msra.mxu0 0.0
    %610 = vmatpush.msra.mxu0 0.0
    %611 = vmatpush.msra.mxu0 0.0
    %612 = vmatpush.msra.mxu0 0.0
    %613 = vmatpush.msra.mxu0 0.0
    %614 = vmatpush.msra.mxu0 %v597
    %615 = vmatmul.f32.gmra.mxu0 %v595
    %v616 = vpop.f32.mrf.mxu0
    %v617 = vadd.f32 0.0, %v616
    %618 = vdwg.mxu0
    %v620 = vsel %vm126, %v617, 0
    %622 = vmatpush.msra.mxu0 0.0
    %623 = vmatpush.msra.mxu0 0.0
    %624 = vmatpush.msra.mxu0 0.0
    %625 = vmatpush.msra.mxu0 0.0
    %626 = vmatpush.msra.mxu0 0.0
    %627 = vmatpush.msra.mxu0 0.0
    %628 = vmatpush.msra.mxu0 0.0
    %629 = vmatpush.msra.mxu0 0.0
    %630 = vmatpush.msra.mxu0 0.0
    %631 = vmatpush.msra.mxu0 0.0
    %632 = vmatpush.msra.mxu0 0.0
    %633 = vmatpush.msra.mxu0 0.0
    %634 = vmatpush.msra.mxu0 0.0
    %635 = vmatpush.msra.mxu0 0.0
    %636 = vmatpush.msra.mxu0 0.0
    %637 = vmatpush.msra.mxu0 %v122
    %638 = vmatmul.f32.gmra.mxu0 %v620
    %v639 = vpop.f32.mrf.mxu0
    %v640 = vadd.f32 0.0, %v639
    %641 = vdwg.mxu0
    %v643 = vsel %vm126, %v551, 0
    %645 = vmatpush.msra.mxu0 0.0
    %646 = vmatpush.msra.mxu0 0.0
    %647 = vmatpush.msra.mxu0 0.0
    %648 = vmatpush.msra.mxu0 0.0
    %649 = vmatpush.msra.mxu0 0.0
    %650 = vmatpush.msra.mxu0 0.0
    %651 = vmatpush.msra.mxu0 0.0
    %652 = vmatpush.msra.mxu0 0.0
    %653 = vmatpush.msra.mxu0 0.0
    %654 = vmatpush.msra.mxu0 0.0
    %655 = vmatpush.msra.mxu0 0.0
    %656 = vmatpush.msra.mxu0 0.0
    %657 = vmatpush.msra.mxu0 0.0
    %658 = vmatpush.msra.mxu0 0.0
    %659 = vmatpush.msra.mxu0 0.0
    %660 = vmatpush.msra.mxu0 %v121
    %661 = vmatmul.f32.gmra.mxu0 %v643
    %v662 = vpop.f32.mrf.mxu0
    %v663 = vadd.f32 %v640, %v662
    %664 = vdwg.mxu0
    %665 = vst.msk [vmem:[#allocation2 + $0xa] sm:$0x1f] %vm304, %v663
    %vm667 = vcmask 1040384
    %v668 = vrot.slane %v113, 7
    %v669 = vrot.slane %v116, 7
    %v670 = vsel %vm667, %v668, %v669
    %671 = vrot.lane.b32.xlu0 %v670, 112
    %v672 = vpop.permute.xlu0 %671
    %v673 = vsel %vm126, %v670, 0
    %v675 = vsel %vm126, %v672, 0
    %677 = vmatpush.xpose.msra.mxu0 0.0
    %678 = vmatpush.xpose.msra.mxu0 0.0
    %679 = vmatpush.xpose.msra.mxu0 0.0
    %680 = vmatpush.xpose.msra.mxu0 0.0
    %681 = vmatpush.xpose.msra.mxu0 0.0
    %682 = vmatpush.xpose.msra.mxu0 0.0
    %683 = vmatpush.xpose.msra.mxu0 0.0
    %684 = vmatpush.xpose.msra.mxu0 0.0
    %685 = vmatpush.xpose.msra.mxu0 0.0
    %686 = vmatpush.xpose.msra.mxu0 0.0
    %687 = vmatpush.xpose.msra.mxu0 0.0
    %688 = vmatpush.xpose.msra.mxu0 0.0
    %689 = vmatpush.xpose.msra.mxu0 0.0
    %690 = vmatpush.xpose.msra.mxu0 0.0
    %691 = vmatpush.xpose.msra.mxu0 0.0
    %692 = vmatpush.xpose.msra.mxu0 %v675
    %693 = vmatmul.f32.gmra.mxu0 %v673
    %v694 = vpop.f32.mrf.mxu0
    %v695 = vadd.f32 0.0, %v694
    %696 = vdwg.mxu0
    %v697 = vsel %vm151, %v695, -inf
    %698 = vmax.xlane.f32.xlu0 %v697
    %v699 = vpop.xlane.xlu0 %698
    %v700 = vsub.f32 %v695, %v699
    %v701 = vmul.f32 %v700, 1.442695
    %v702 = vpow.pop %v701
    %v703 = vsel %vm151, %v702, 0.0
    %704 = vadd.xlane.f32.xlu0 %v703
    %v705 = vpop.xlane.xlu0 %704
    %v706 = vrcp.pop %v705
    %v707 = vmul.f32 %v702, %v706
    %708 = vrot.lane.b32.xlu0 %v670, 96
    %v709 = vpop.permute.xlu0 %708
    %v711 = vsel %vm165, %v707, 0
    %v713 = vsel %vm169, %v709, 0
    %715 = vmatpush.msra.mxu0 0.0
    %716 = vmatpush.msra.mxu0 0.0
    %717 = vmatpush.msra.mxu0 0.0
    %718 = vmatpush.msra.mxu0 0.0
    %719 = vmatpush.msra.mxu0 0.0
    %720 = vmatpush.msra.mxu0 0.0
    %721 = vmatpush.msra.mxu0 0.0
    %722 = vmatpush.msra.mxu0 0.0
    %723 = vmatpush.msra.mxu0 0.0
    %724 = vmatpush.msra.mxu0 0.0
    %725 = vmatpush.msra.mxu0 0.0
    %726 = vmatpush.msra.mxu0 0.0
    %727 = vmatpush.msra.mxu0 0.0
    %728 = vmatpush.msra.mxu0 0.0
    %729 = vmatpush.msra.mxu0 0.0
    %730 = vmatpush.msra.mxu0 %v713
    %731 = vmatmul.f32.gmra.mxu0 %v711
    %v732 = vpop.f32.mrf.mxu0
    %v733 = vadd.f32 0.0, %v732
    %734 = vdwg.mxu0
    %735 = vrot.lane.b32.xlu0 %v670, 120
    %v736 = vpop.permute.xlu0 %735
    %737 = vrot.lane.b32.xlu0 %v670, 104
    %v738 = vpop.permute.xlu0 %737
    %v739 = vsel %vm126, %v736, 0
    %v741 = vsel %vm126, %v738, 0
    %743 = vmatpush.xpose.msra.mxu0 0.0
    %744 = vmatpush.xpose.msra.mxu0 0.0
    %745 = vmatpush.xpose.msra.mxu0 0.0
    %746 = vmatpush.xpose.msra.mxu0 0.0
    %747 = vmatpush.xpose.msra.mxu0 0.0
    %748 = vmatpush.xpose.msra.mxu0 0.0
    %749 = vmatpush.xpose.msra.mxu0 0.0
    %750 = vmatpush.xpose.msra.mxu0 0.0
    %751 = vmatpush.xpose.msra.mxu0 0.0
    %752 = vmatpush.xpose.msra.mxu0 0.0
    %753 = vmatpush.xpose.msra.mxu0 0.0
    %754 = vmatpush.xpose.msra.mxu0 0.0
    %755 = vmatpush.xpose.msra.mxu0 0.0
    %756 = vmatpush.xpose.msra.mxu0 0.0
    %757 = vmatpush.xpose.msra.mxu0 0.0
    %758 = vmatpush.xpose.msra.mxu0 %v741
    %759 = vmatmul.f32.gmra.mxu0 %v739
    %v760 = vpop.f32.mrf.mxu0
    %v761 = vadd.f32 0.0, %v760
    %762 = vdwg.mxu0
    %v763 = vsel %vm151, %v761, -inf
    %764 = vmax.xlane.f32.xlu0 %v763
    %v765 = vpop.xlane.xlu0 %764
    %v766 = vsub.f32 %v761, %v765
    %v767 = vmul.f32 %v766, 1.442695
    %v768 = vpow.pop %v767
    %v769 = vsel %vm151, %v768, 0.0
    %770 = vadd.xlane.f32.xlu0 %v769
    %v771 = vpop.xlane.xlu0 %770
    %v772 = vrcp.pop %v771
    %v773 = vmul.f32 %v768, %v772
    %774 = vrot.lane.b32.xlu0 %v670, 88
    %v775 = vpop.permute.xlu0 %774
    %v777 = vsel %vm165, %v773, 0
    %v779 = vsel %vm169, %v775, 0
    %781 = vmatpush.msra.mxu0 0.0
    %782 = vmatpush.msra.mxu0 0.0
    %783 = vmatpush.msra.mxu0 0.0
    %784 = vmatpush.msra.mxu0 0.0
    %785 = vmatpush.msra.mxu0 0.0
    %786 = vmatpush.msra.mxu0 0.0
    %787 = vmatpush.msra.mxu0 0.0
    %788 = vmatpush.msra.mxu0 0.0
    %789 = vmatpush.msra.mxu0 0.0
    %790 = vmatpush.msra.mxu0 0.0
    %791 = vmatpush.msra.mxu0 0.0
    %792 = vmatpush.msra.mxu0 0.0
    %793 = vmatpush.msra.mxu0 0.0
    %794 = vmatpush.msra.mxu0 0.0
    %795 = vmatpush.msra.mxu0 0.0
    %796 = vmatpush.msra.mxu0 %v779
    %797 = vmatmul.f32.gmra.mxu0 %v777
    %v798 = vpop.f32.mrf.mxu0
    %v799 = vadd.f32 0.0, %v798
    %800 = vdwg.mxu0
    %v802 = vsel %vm126, %v799, 0
    %804 = vmatpush.msra.mxu0 0.0
    %805 = vmatpush.msra.mxu0 0.0
    %806 = vmatpush.msra.mxu0 0.0
    %807 = vmatpush.msra.mxu0 0.0
    %808 = vmatpush.msra.mxu0 0.0
    %809 = vmatpush.msra.mxu0 0.0
    %810 = vmatpush.msra.mxu0 0.0
    %811 = vmatpush.msra.mxu0 0.0
    %812 = vmatpush.msra.mxu0 0.0
    %813 = vmatpush.msra.mxu0 0.0
    %814 = vmatpush.msra.mxu0 0.0
    %815 = vmatpush.msra.mxu0 0.0
    %816 = vmatpush.msra.mxu0 0.0
    %817 = vmatpush.msra.mxu0 0.0
    %818 = vmatpush.msra.mxu0 0.0
    %819 = vmatpush.msra.mxu0 %v122
    %820 = vmatmul.f32.gmra.mxu0 %v802
    %v821 = vpop.f32.mrf.mxu0
    %v822 = vadd.f32 0.0, %v821
    %823 = vdwg.mxu0
    %v825 = vsel %vm126, %v733, 0
    %827 = vmatpush.msra.mxu0 0.0
    %828 = vmatpush.msra.mxu0 0.0
    %829 = vmatpush.msra.mxu0 0.0
    %830 = vmatpush.msra.mxu0 0.0
    %831 = vmatpush.msra.mxu0 0.0
    %832 = vmatpush.msra.mxu0 0.0
    %833 = vmatpush.msra.mxu0 0.0
    %834 = vmatpush.msra.mxu0 0.0
    %835 = vmatpush.msra.mxu0 0.0
    %836 = vmatpush.msra.mxu0 0.0
    %837 = vmatpush.msra.mxu0 0.0
    %838 = vmatpush.msra.mxu0 0.0
    %839 = vmatpush.msra.mxu0 0.0
    %840 = vmatpush.msra.mxu0 0.0
    %841 = vmatpush.msra.mxu0 0.0
    %842 = vmatpush.msra.mxu0 %v121
    %843 = vmatmul.f32.gmra.mxu0 %v825
    %v844 = vpop.f32.mrf.mxu0
    %v845 = vadd.f32 %v822, %v844
    %846 = vdwg.mxu0
    %847 = vst.msk [vmem:[#allocation2 + $0xf] sm:$0x1f] %vm304, %v845
    %vm849 = vcmask 1043456
    %v850 = vrot.slane %v116, 4
    %v851 = vrot.slane %v119, 4
    %v852 = vsel %vm849, %v850, %v851
    %853 = vrot.lane.b32.xlu0 %v852, 112
    %v854 = vpop.permute.xlu0 %853
    %v855 = vsel %vm126, %v852, 0
    %v857 = vsel %vm126, %v854, 0
    %859 = vmatpush.xpose.msra.mxu0 0.0
    %860 = vmatpush.xpose.msra.mxu0 0.0
    %861 = vmatpush.xpose.msra.mxu0 0.0
    %862 = vmatpush.xpose.msra.mxu0 0.0
    %863 = vmatpush.xpose.msra.mxu0 0.0
    %864 = vmatpush.xpose.msra.mxu0 0.0
    %865 = vmatpush.xpose.msra.mxu0 0.0
    %866 = vmatpush.xpose.msra.mxu0 0.0
    %867 = vmatpush.xpose.msra.mxu0 0.0
    %868 = vmatpush.xpose.msra.mxu0 0.0
    %869 = vmatpush.xpose.msra.mxu0 0.0
    %870 = vmatpush.xpose.msra.mxu0 0.0
    %871 = vmatpush.xpose.msra.mxu0 0.0
    %872 = vmatpush.xpose.msra.mxu0 0.0
    %873 = vmatpush.xpose.msra.mxu0 0.0
    %874 = vmatpush.xpose.msra.mxu0 %v857
    %875 = vmatmul.f32.gmra.mxu0 %v855
    %v876 = vpop.f32.mrf.mxu0
    %v877 = vadd.f32 0.0, %v876
    %878 = vdwg.mxu0
    %v879 = vsel %vm151, %v877, -inf
    %880 = vmax.xlane.f32.xlu0 %v879
    %v881 = vpop.xlane.xlu0 %880
    %v882 = vsub.f32 %v877, %v881
    %v883 = vmul.f32 %v882, 1.442695
    %v884 = vpow.pop %v883
    %v885 = vsel %vm151, %v884, 0.0
    %886 = vadd.xlane.f32.xlu0 %v885
    %v887 = vpop.xlane.xlu0 %886
    %v888 = vrcp.pop %v887
    %v889 = vmul.f32 %v884, %v888
    %890 = vrot.lane.b32.xlu0 %v852, 96
    %v891 = vpop.permute.xlu0 %890
    %v893 = vsel %vm165, %v889, 0
    %v895 = vsel %vm169, %v891, 0
    %897 = vmatpush.msra.mxu0 0.0
    %898 = vmatpush.msra.mxu0 0.0
    %899 = vmatpush.msra.mxu0 0.0
    %900 = vmatpush.msra.mxu0 0.0
    %901 = vmatpush.msra.mxu0 0.0
    %902 = vmatpush.msra.mxu0 0.0
    %903 = vmatpush.msra.mxu0 0.0
    %904 = vmatpush.msra.mxu0 0.0
    %905 = vmatpush.msra.mxu0 0.0
    %906 = vmatpush.msra.mxu0 0.0
    %907 = vmatpush.msra.mxu0 0.0
    %908 = vmatpush.msra.mxu0 0.0
    %909 = vmatpush.msra.mxu0 0.0
    %910 = vmatpush.msra.mxu0 0.0
    %911 = vmatpush.msra.mxu0 0.0
    %912 = vmatpush.msra.mxu0 %v895
    %913 = vmatmul.f32.gmra.mxu0 %v893
    %v914 = vpop.f32.mrf.mxu0
    %v915 = vadd.f32 0.0, %v914
    %916 = vdwg.mxu0
    %917 = vrot.lane.b32.xlu0 %v852, 120
    %v918 = vpop.permute.xlu0 %917
    %919 = vrot.lane.b32.xlu0 %v852, 104
    %v920 = vpop.permute.xlu0 %919
    %v921 = vsel %vm126, %v918, 0
    %v923 = vsel %vm126, %v920, 0
    %925 = vmatpush.xpose.msra.mxu0 0.0
    %926 = vmatpush.xpose.msra.mxu0 0.0
    %927 = vmatpush.xpose.msra.mxu0 0.0
    %928 = vmatpush.xpose.msra.mxu0 0.0
    %929 = vmatpush.xpose.msra.mxu0 0.0
    %930 = vmatpush.xpose.msra.mxu0 0.0
    %931 = vmatpush.xpose.msra.mxu0 0.0
    %932 = vmatpush.xpose.msra.mxu0 0.0
    %933 = vmatpush.xpose.msra.mxu0 0.0
    %934 = vmatpush.xpose.msra.mxu0 0.0
    %935 = vmatpush.xpose.msra.mxu0 0.0
    %936 = vmatpush.xpose.msra.mxu0 0.0
    %937 = vmatpush.xpose.msra.mxu0 0.0
    %938 = vmatpush.xpose.msra.mxu0 0.0
    %939 = vmatpush.xpose.msra.mxu0 0.0
    %940 = vmatpush.xpose.msra.mxu0 %v923
    %941 = vmatmul.f32.gmra.mxu0 %v921
    %v942 = vpop.f32.mrf.mxu0
    %v943 = vadd.f32 0.0, %v942
    %944 = vdwg.mxu0
    %v945 = vsel %vm151, %v943, -inf
    %946 = vmax.xlane.f32.xlu0 %v945
    %v947 = vpop.xlane.xlu0 %946
    %v948 = vsub.f32 %v943, %v947
    %v949 = vmul.f32 %v948, 1.442695
    %v950 = vpow.pop %v949
    %v951 = vsel %vm151, %v950, 0.0
    %952 = vadd.xlane.f32.xlu0 %v951
    %v953 = vpop.xlane.xlu0 %952
    %v954 = vrcp.pop %v953
    %v955 = vmul.f32 %v950, %v954
    %956 = vrot.lane.b32.xlu0 %v852, 88
    %v957 = vpop.permute.xlu0 %956
    %v959 = vsel %vm165, %v955, 0
    %v961 = vsel %vm169, %v957, 0
    %963 = vmatpush.msra.mxu0 0.0
    %964 = vmatpush.msra.mxu0 0.0
    %965 = vmatpush.msra.mxu0 0.0
    %966 = vmatpush.msra.mxu0 0.0
    %967 = vmatpush.msra.mxu0 0.0
    %968 = vmatpush.msra.mxu0 0.0
    %969 = vmatpush.msra.mxu0 0.0
    %970 = vmatpush.msra.mxu0 0.0
    %971 = vmatpush.msra.mxu0 0.0
    %972 = vmatpush.msra.mxu0 0.0
    %973 = vmatpush.msra.mxu0 0.0
    %974 = vmatpush.msra.mxu0 0.0
    %975 = vmatpush.msra.mxu0 0.0
    %976 = vmatpush.msra.mxu0 0.0
    %977 = vmatpush.msra.mxu0 0.0
    %978 = vmatpush.msra.mxu0 %v961
    %979 = vmatmul.f32.gmra.mxu0 %v959
    %v980 = vpop.f32.mrf.mxu0
    %v981 = vadd.f32 0.0, %v980
    %982 = vdwg.mxu0
    %v984 = vsel %vm126, %v981, 0
    %986 = vmatpush.msra.mxu0 0.0
    %987 = vmatpush.msra.mxu0 0.0
    %988 = vmatpush.msra.mxu0 0.0
    %989 = vmatpush.msra.mxu0 0.0
    %990 = vmatpush.msra.mxu0 0.0
    %991 = vmatpush.msra.mxu0 0.0
    %992 = vmatpush.msra.mxu0 0.0
    %993 = vmatpush.msra.mxu0 0.0
    %994 = vmatpush.msra.mxu0 0.0
    %995 = vmatpush.msra.mxu0 0.0
    %996 = vmatpush.msra.mxu0 0.0
    %997 = vmatpush.msra.mxu0 0.0
    %998 = vmatpush.msra.mxu0 0.0
    %999 = vmatpush.msra.mxu0 0.0
    %1000 = vmatpush.msra.mxu0 0.0
    %1001 = vmatpush.msra.mxu0 %v122
    %1002 = vmatmul.f32.gmra.mxu0 %v984
    %v1003 = vpop.f32.mrf.mxu0
    %v1004 = vadd.f32 0.0, %v1003
    %1005 = vdwg.mxu0
    %v1007 = vsel %vm126, %v915, 0
    %1009 = vmatpush.msra.mxu0 0.0
    %1010 = vmatpush.msra.mxu0 0.0
    %1011 = vmatpush.msra.mxu0 0.0
    %1012 = vmatpush.msra.mxu0 0.0
    %1013 = vmatpush.msra.mxu0 0.0
    %1014 = vmatpush.msra.mxu0 0.0
    %1015 = vmatpush.msra.mxu0 0.0
    %1016 = vmatpush.msra.mxu0 0.0
    %1017 = vmatpush.msra.mxu0 0.0
    %1018 = vmatpush.msra.mxu0 0.0
    %1019 = vmatpush.msra.mxu0 0.0
    %1020 = vmatpush.msra.mxu0 0.0
    %1021 = vmatpush.msra.mxu0 0.0
    %1022 = vmatpush.msra.mxu0 0.0
    %1023 = vmatpush.msra.mxu0 0.0
    %1024 = vmatpush.msra.mxu0 %v121
    %1025 = vmatmul.f32.gmra.mxu0 %v1007
    %v1026 = vpop.f32.mrf.mxu0
    %v1027 = vadd.f32 %v1004, %v1026
    %1028 = vdwg.mxu0
    %1029 = vst.msk [vmem:[#allocation2 + $0x14] sm:$0x1f] %vm304, %v1027
    %v1030 = vrot.slane %v119, 1
    %1031 = vrot.lane.b32.xlu0 %v1030, 112
    %v1032 = vpop.permute.xlu0 %1031
    %v1033 = vsel %vm126, %v1030, 0
    %v1035 = vsel %vm126, %v1032, 0
    %1037 = vmatpush.xpose.msra.mxu0 0.0
    %1038 = vmatpush.xpose.msra.mxu0 0.0
    %1039 = vmatpush.xpose.msra.mxu0 0.0
    %1040 = vmatpush.xpose.msra.mxu0 0.0
    %1041 = vmatpush.xpose.msra.mxu0 0.0
    %1042 = vmatpush.xpose.msra.mxu0 0.0
    %1043 = vmatpush.xpose.msra.mxu0 0.0
    %1044 = vmatpush.xpose.msra.mxu0 0.0
    %1045 = vmatpush.xpose.msra.mxu0 0.0
    %1046 = vmatpush.xpose.msra.mxu0 0.0
    %1047 = vmatpush.xpose.msra.mxu0 0.0
    %1048 = vmatpush.xpose.msra.mxu0 0.0
    %1049 = vmatpush.xpose.msra.mxu0 0.0
    %1050 = vmatpush.xpose.msra.mxu0 0.0
    %1051 = vmatpush.xpose.msra.mxu0 0.0
    %1052 = vmatpush.xpose.msra.mxu0 %v1035
    %1053 = vmatmul.f32.gmra.mxu0 %v1033
    %v1054 = vpop.f32.mrf.mxu0
    %v1055 = vadd.f32 0.0, %v1054
    %1056 = vdwg.mxu0
    %v1057 = vsel %vm151, %v1055, -inf
    %1058 = vmax.xlane.f32.xlu0 %v1057
    %v1059 = vpop.xlane.xlu0 %1058
    %v1060 = vsub.f32 %v1055, %v1059
    %v1061 = vmul.f32 %v1060, 1.442695
    %v1062 = vpow.pop %v1061
    %v1063 = vsel %vm151, %v1062, 0.0
    %1064 = vadd.xlane.f32.xlu0 %v1063
    %v1065 = vpop.xlane.xlu0 %1064
    %v1066 = vrcp.pop %v1065
    %v1067 = vmul.f32 %v1062, %v1066
    %1068 = vrot.lane.b32.xlu0 %v1030, 96
    %v1069 = vpop.permute.xlu0 %1068
    %v1071 = vsel %vm165, %v1067, 0
    %v1073 = vsel %vm169, %v1069, 0
    %1075 = vmatpush.msra.mxu0 0.0
    %1076 = vmatpush.msra.mxu0 0.0
    %1077 = vmatpush.msra.mxu0 0.0
    %1078 = vmatpush.msra.mxu0 0.0
    %1079 = vmatpush.msra.mxu0 0.0
    %1080 = vmatpush.msra.mxu0 0.0
    %1081 = vmatpush.msra.mxu0 0.0
    %1082 = vmatpush.msra.mxu0 0.0
    %1083 = vmatpush.msra.mxu0 0.0
    %1084 = vmatpush.msra.mxu0 0.0
    %1085 = vmatpush.msra.mxu0 0.0
    %1086 = vmatpush.msra.mxu0 0.0
    %1087 = vmatpush.msra.mxu0 0.0
    %1088 = vmatpush.msra.mxu0 0.0
    %1089 = vmatpush.msra.mxu0 0.0
    %1090 = vmatpush.msra.mxu0 %v1073
    %1091 = vmatmul.f32.gmra.mxu0 %v1071
    %v1092 = vpop.f32.mrf.mxu0
    %v1093 = vadd.f32 0.0, %v1092
    %1094 = vdwg.mxu0
    %1095 = vrot.lane.b32.xlu0 %v1030, 120
    %v1096 = vpop.permute.xlu0 %1095
    %1097 = vrot.lane.b32.xlu0 %v1030, 104
    %v1098 = vpop.permute.xlu0 %1097
    %v1099 = vsel %vm126, %v1096, 0
    %v1101 = vsel %vm126, %v1098, 0
    %1103 = vmatpush.xpose.msra.mxu0 0.0
    %1104 = vmatpush.xpose.msra.mxu0 0.0
    %1105 = vmatpush.xpose.msra.mxu0 0.0
    %1106 = vmatpush.xpose.msra.mxu0 0.0
    %1107 = vmatpush.xpose.msra.mxu0 0.0
    %1108 = vmatpush.xpose.msra.mxu0 0.0
    %1109 = vmatpush.xpose.msra.mxu0 0.0
    %1110 = vmatpush.xpose.msra.mxu0 0.0
    %1111 = vmatpush.xpose.msra.mxu0 0.0
    %1112 = vmatpush.xpose.msra.mxu0 0.0
    %1113 = vmatpush.xpose.msra.mxu0 0.0
    %1114 = vmatpush.xpose.msra.mxu0 0.0
    %1115 = vmatpush.xpose.msra.mxu0 0.0
    %1116 = vmatpush.xpose.msra.mxu0 0.0
    %1117 = vmatpush.xpose.msra.mxu0 0.0
    %1118 = vmatpush.xpose.msra.mxu0 %v1101
    %1119 = vmatmul.f32.gmra.mxu0 %v1099
    %v1120 = vpop.f32.mrf.mxu0
    %v1121 = vadd.f32 0.0, %v1120
    %1122 = vdwg.mxu0
    %v1123 = vsel %vm151, %v1121, -inf
    %1124 = vmax.xlane.f32.xlu0 %v1123
    %v1125 = vpop.xlane.xlu0 %1124
    %v1126 = vsub.f32 %v1121, %v1125
    %v1127 = vmul.f32 %v1126, 1.442695
    %v1128 = vpow.pop %v1127
    %v1129 = vsel %vm151, %v1128, 0.0
    %1130 = vadd.xlane.f32.xlu0 %v1129
    %v1131 = vpop.xlane.xlu0 %1130
    %v1132 = vrcp.pop %v1131
    %v1133 = vmul.f32 %v1128, %v1132
    %1134 = vrot.lane.b32.xlu0 %v1030, 88
    %v1135 = vpop.permute.xlu0 %1134
    %v1137 = vsel %vm165, %v1133, 0
    %v1139 = vsel %vm169, %v1135, 0
    %1141 = vmatpush.msra.mxu0 0.0
    %1142 = vmatpush.msra.mxu0 0.0
    %1143 = vmatpush.msra.mxu0 0.0
    %1144 = vmatpush.msra.mxu0 0.0
    %1145 = vmatpush.msra.mxu0 0.0
    %1146 = vmatpush.msra.mxu0 0.0
    %1147 = vmatpush.msra.mxu0 0.0
    %1148 = vmatpush.msra.mxu0 0.0
    %1149 = vmatpush.msra.mxu0 0.0
    %1150 = vmatpush.msra.mxu0 0.0
    %1151 = vmatpush.msra.mxu0 0.0
    %1152 = vmatpush.msra.mxu0 0.0
    %1153 = vmatpush.msra.mxu0 0.0
    %1154 = vmatpush.msra.mxu0 0.0
    %1155 = vmatpush.msra.mxu0 0.0
    %1156 = vmatpush.msra.mxu0 %v1139
    %1157 = vmatmul.f32.gmra.mxu0 %v1137
    %v1158 = vpop.f32.mrf.mxu0
    %v1159 = vadd.f32 0.0, %v1158
    %1160 = vdwg.mxu0
    %v1162 = vsel %vm126, %v1159, 0
    %1164 = vmatpush.msra.mxu0 0.0
    %1165 = vmatpush.msra.mxu0 0.0
    %1166 = vmatpush.msra.mxu0 0.0
    %1167 = vmatpush.msra.mxu0 0.0
    %1168 = vmatpush.msra.mxu0 0.0
    %1169 = vmatpush.msra.mxu0 0.0
    %1170 = vmatpush.msra.mxu0 0.0
    %1171 = vmatpush.msra.mxu0 0.0
    %1172 = vmatpush.msra.mxu0 0.0
    %1173 = vmatpush.msra.mxu0 0.0
    %1174 = vmatpush.msra.mxu0 0.0
    %1175 = vmatpush.msra.mxu0 0.0
    %1176 = vmatpush.msra.mxu0 0.0
    %1177 = vmatpush.msra.mxu0 0.0
    %1178 = vmatpush.msra.mxu0 0.0
    %1179 = vmatpush.msra.mxu0 %v122
    %1180 = vmatmul.f32.gmra.mxu0 %v1162
    %v1181 = vpop.f32.mrf.mxu0
    %v1182 = vadd.f32 0.0, %v1181
    %1183 = vdwg.mxu0
    %v1185 = vsel %vm126, %v1093, 0
    %1187 = vmatpush.msra.mxu0 0.0
    %1188 = vmatpush.msra.mxu0 0.0
    %1189 = vmatpush.msra.mxu0 0.0
    %1190 = vmatpush.msra.mxu0 0.0
    %1191 = vmatpush.msra.mxu0 0.0
    %1192 = vmatpush.msra.mxu0 0.0
    %1193 = vmatpush.msra.mxu0 0.0
    %1194 = vmatpush.msra.mxu0 0.0
    %1195 = vmatpush.msra.mxu0 0.0
    %1196 = vmatpush.msra.mxu0 0.0
    %1197 = vmatpush.msra.mxu0 0.0
    %1198 = vmatpush.msra.mxu0 0.0
    %1199 = vmatpush.msra.mxu0 0.0
    %1200 = vmatpush.msra.mxu0 0.0
    %1201 = vmatpush.msra.mxu0 0.0
    %1202 = vmatpush.msra.mxu0 %v121
    %1203 = vmatmul.f32.gmra.mxu0 %v1185
    %v1204 = vpop.f32.mrf.mxu0
    %v1205 = vadd.f32 %v1182, %v1204
    %1206 = vdwg.mxu0
    %1207 = vst.msk [vmem:[#allocation2 + $0x19] sm:$0x1f] %vm304, %v1205
    %v1208 = vld [vmem:[#allocation2] sm:$0xff]
    %v1209 = vld [vmem:[#allocation2 + $0x8] sm:$0xff]
    %v1210 = vld [vmem:[#allocation2 + $0x10] sm:$0xff]
    %v1211 = vld [vmem:[#allocation2 + $0x18] sm:$0x3f]
    %v1212 = vadd.f32 %v69, %v1208
    %v1213 = vadd.f32 %v70, %v1209
    %v1214 = vadd.f32 %v71, %v1210
    %v1215 = vadd.f32 %v72, %v1211
    %v1216 = vld [vmem:[%s8] sm:$0x1]
    %v1218 = vperm.slane %v1216, 0
    %v1220 = vadd.f32 %v1212, %v1218
    %v1221 = vadd.f32 %v1213, %v1218
    %v1222 = vadd.f32 %v1214, %v1218
    %v1223 = vadd.f32 %v1215, %v1218
    %v1224 = vld [vmem:[%s3] sm:$0x1]
    %v1225 = vld [vmem:[%s4] sm:$0x1]
    %v1226 = vsel %vm79, %v1220, 0.0
    %1227 = vadd.xlane.f32.xlu0 %v1226
    %v1228 = vpop.xlane.xlu0 %1227
    %v1229 = vsel %vm79, %v1221, 0.0
    %1230 = vadd.xlane.f32.xlu0 %v1229
    %v1231 = vpop.xlane.xlu0 %1230
    %v1232 = vsel %vm79, %v1222, 0.0
    %1233 = vadd.xlane.f32.xlu0 %v1232
    %v1234 = vpop.xlane.xlu0 %1233
    %vm1235 = vcmask 128000
    %v1236 = vsel %vm1235, %v1223, 0.0
    %1237 = vadd.xlane.f32.xlu0 %v1236
    %v1238 = vpop.xlane.xlu0 %1237
    %v1239 = vrcp.pop 16.0
    %v1240 = vmul.f32 16.0, %v1239
    %v1241 = vsub.f32 1.0, %v1240
    %v1242 = vmul.f32 %v1239, %v1241
    %v1243 = vadd.f32 %v1239, %v1242
    %vm1244 = vweird.f32 %v1239
    %v1245 = vsel %vm1244, %v1239, %v1243
    %v1246 = vmul.f32 %v1228, %v1245
    %v1247 = vmul.f32 %v1231, %v1245
    %v1248 = vmul.f32 %v1234, %v1245
    %v1249 = vmul.f32 %v1238, %v1245
    %v1250 = vsub.f32 %v1220, %v1246
    %v1251 = vsub.f32 %v1221, %v1247
    %v1252 = vsub.f32 %v1222, %v1248
    %v1253 = vsub.f32 %v1223, %v1249
    %v1254 = vmul.f32 %v1250, %v1250
    %v1255 = vmul.f32 %v1251, %v1251
    %v1256 = vmul.f32 %v1252, %v1252
    %v1257 = vmul.f32 %v1253, %v1253
    %v1258 = vsel %vm79, %v1254, 0.0
    %1259 = vadd.xlane.f32.xlu0 %v1258
    %v1260 = vpop.xlane.xlu0 %1259
    %v1261 = vsel %vm79, %v1255, 0.0
    %1262 = vadd.xlane.f32.xlu0 %v1261
    %v1263 = vpop.xlane.xlu0 %1262
    %v1264 = vsel %vm79, %v1256, 0.0
    %1265 = vadd.xlane.f32.xlu0 %v1264
    %v1266 = vpop.xlane.xlu0 %1265
    %v1267 = vsel %vm1235, %v1257, 0.0
    %1268 = vadd.xlane.f32.xlu0 %v1267
    %v1269 = vpop.xlane.xlu0 %1268
    %v1270 = vmul.f32 %v1260, %v1245
    %v1271 = vmul.f32 %v1263, %v1245
    %v1272 = vmul.f32 %v1266, %v1245
    %v1273 = vmul.f32 %v1269, %v1245
    %v1274 = vadd.f32 %v1270, 1e-05
    %v1275 = vadd.f32 %v1271, 1e-05
    %v1276 = vadd.f32 %v1272, 1e-05
    %v1277 = vadd.f32 %v1273, 1e-05
    %v1278 = vrsqrt.pop %v1274
    %v1279 = vmul.f32 %v1278, %v1274
    %v1280 = vmul.f32 %v1279, %v1278
    %v1281 = vmul.f32 0.5, %v1280
    %v1282 = vsub.f32 1.5, %v1281
    %v1283 = vmul.f32 %v1278, %v1282
    %vm1284 = vweird.f32 %v1274
    %vm1285 = vweird.f32 %v1278
    %vm1286 = vmor %vm1284, %vm1285
    %v1287 = vsel %vm1286, %v1278, %v1283
    %v1288 = vrsqrt.pop %v1275
    %v1289 = vmul.f32 %v1288, %v1275
    %v1290 = vmul.f32 %v1289, %v1288
    %v1291 = vmul.f32 0.5, %v1290
    %v1292 = vsub.f32 1.5, %v1291
    %v1293 = vmul.f32 %v1288, %v1292
    %vm1294 = vweird.f32 %v1275
    %vm1295 = vweird.f32 %v1288
    %vm1296 = vmor %vm1294, %vm1295
    %v1297 = vsel %vm1296, %v1288, %v1293
    %v1298 = vrsqrt.pop %v1276
    %v1299 = vmul.f32 %v1298, %v1276
    %v1300 = vmul.f32 %v1299, %v1298
    %v1301 = vmul.f32 0.5, %v1300
    %v1302 = vsub.f32 1.5, %v1301
    %v1303 = vmul.f32 %v1298, %v1302
    %vm1304 = vweird.f32 %v1276
    %vm1305 = vweird.f32 %v1298
    %vm1306 = vmor %vm1304, %vm1305
    %v1307 = vsel %vm1306, %v1298, %v1303
    %v1308 = vrsqrt.pop %v1277
    %v1309 = vmul.f32 %v1308, %v1277
    %v1310 = vmul.f32 %v1309, %v1308
    %v1311 = vmul.f32 0.5, %v1310
    %v1312 = vsub.f32 1.5, %v1311
    %v1313 = vmul.f32 %v1308, %v1312
    %vm1314 = vweird.f32 %v1277
    %vm1315 = vweird.f32 %v1308
    %vm1316 = vmor %vm1314, %vm1315
    %v1317 = vsel %vm1316, %v1308, %v1313
    %v1318 = vmul.f32 %v1250, %v1287
    %v1319 = vmul.f32 %v1251, %v1297
    %v1320 = vmul.f32 %v1252, %v1307
    %v1321 = vmul.f32 %v1253, %v1317
    %v1323 = vperm.slane %v1224, 0
    %v1325 = vmul.f32 %v1318, %v1323
    %v1326 = vmul.f32 %v1319, %v1323
    %v1327 = vmul.f32 %v1320, %v1323
    %v1328 = vmul.f32 %v1321, %v1323
    %v1330 = vperm.slane %v1225, 0
    %v1332 = vadd.f32 %v1325, %v1330
    %v1333 = vadd.f32 %v1326, %v1330
    %v1334 = vadd.f32 %v1327, %v1330
    %v1335 = vadd.f32 %v1328, %v1330
    %v1336 = vld [vmem:[%s11] sm:$0xff]
    %v1337 = vld [vmem:[%s11 + $0x8] sm:$0xff]
    %v1338 = vld [vmem:[%s12] sm:$0x1]
    %v1340 = vperm.slane %v1338, 0
    %v1343 = vsel %vm79, %v1332, 0
    %v1346 = vsel %vm79, %v1333, 0
    %v1349 = vsel %vm79, %v1334, 0
    %v1352 = vsel %vm79, %v1335, 0
    %1354 = vmatpush.msra.mxu0 0.0
    %1355 = vmatpush.msra.mxu0 0.0
    %1356 = vmatpush.msra.mxu0 0.0
    %1357 = vmatpush.msra.mxu0 0.0
    %1358 = vmatpush.msra.mxu0 0.0
    %1359 = vmatpush.msra.mxu0 0.0
    %1360 = vmatpush.msra.mxu0 0.0
    %1361 = vmatpush.msra.mxu0 0.0
    %1362 = vmatpush.msra.mxu0 0.0
    %1363 = vmatpush.msra.mxu0 0.0
    %1364 = vmatpush.msra.mxu0 0.0
    %1365 = vmatpush.msra.mxu0 0.0
    %1366 = vmatpush.msra.mxu0 0.0
    %1367 = vmatpush.msra.mxu0 0.0
    %1368 = vmatpush.msra.mxu0 %v1337
    %1369 = vmatpush.msra.mxu0 %v1336
    %1370 = vmatmul.f32.gmra.mxu0 %v1343
    %v1371 = vpop.f32.mrf.mxu0
    %v1372 = vadd.f32 %v1340, %v1371
    %1373 = vmatmul.f32.gmra.mxu0 %v1346
    %v1374 = vpop.f32.mrf.mxu0
    %v1375 = vadd.f32 %v1340, %v1374
    %1376 = vmatmul.f32.gmra.mxu0 %v1349
    %v1377 = vpop.f32.mrf.mxu0
    %v1378 = vadd.f32 %v1340, %v1377
    %1379 = vmatmul.f32.gmra.mxu0 %v1352
    %v1380 = vpop.f32.mrf.mxu0
    %v1381 = vadd.f32 %v1340, %v1380
    %1382 = vdwg.mxu0
    %v1383 = vmax.f32 %v1372, 0.0
    %v1384 = vmax.f32 %v1375, 0.0
    %v1385 = vmax.f32 %v1378, 0.0
    %v1386 = vmax.f32 %v1381, 0.0
    %v1387 = vld [vmem:[%s13] sm:$0xff]
    %v1388 = vld [vmem:[%s13 + $0x8] sm:$0xff]
    %v1389 = vld [vmem:[%s13 + $0x10] sm:$0xff]
    %v1390 = vld [vmem:[%s13 + $0x18] sm:$0xff]
    %v1391 = vld [vmem:[%s14] sm:$0x1]
    %v1393 = vperm.slane %v1391, 0
    %vm1395 = vcmask 261120
    %v1397 = vsel %vm1395, %v1383, 0
    %v1400 = vsel %vm1395, %v1384, 0
    %v1403 = vsel %vm1395, %v1385, 0
    %v1406 = vsel %vm1395, %v1386, 0
    %1408 = vmatpush.msra.mxu0 0.0
    %1409 = vmatpush.msra.mxu0 0.0
    %1410 = vmatpush.msra.mxu0 0.0
    %1411 = vmatpush.msra.mxu0 0.0
    %1412 = vmatpush.msra.mxu0 0.0
    %1413 = vmatpush.msra.mxu0 0.0
    %1414 = vmatpush.msra.mxu0 0.0
    %1415 = vmatpush.msra.mxu0 0.0
    %1416 = vmatpush.msra.mxu0 0.0
    %1417 = vmatpush.msra.mxu0 0.0
    %1418 = vmatpush.msra.mxu0 0.0
    %1419 = vmatpush.msra.mxu0 0.0
    %1420 = vmatpush.msra.mxu0 %v1390
    %1421 = vmatpush.msra.mxu0 %v1389
    %1422 = vmatpush.msra.mxu0 %v1388
    %1423 = vmatpush.msra.mxu0 %v1387
    %1424 = vmatmul.f32.gmra.mxu0 %v1397
    %v1425 = vpop.f32.mrf.mxu0
    %v1426 = vadd.f32 %v1393, %v1425
    %1427 = vmatmul.f32.gmra.mxu0 %v1400
    %v1428 = vpop.f32.mrf.mxu0
    %v1429 = vadd.f32 %v1393, %v1428
    %1430 = vmatmul.f32.gmra.mxu0 %v1403
    %v1431 = vpop.f32.mrf.mxu0
    %v1432 = vadd.f32 %v1393, %v1431
    %1433 = vmatmul.f32.gmra.mxu0 %v1406
    %v1434 = vpop.f32.mrf.mxu0
    %v1435 = vadd.f32 %v1393, %v1434
    %1436 = vdwg.mxu0
    %v1437 = vadd.f32 %v1332, %v1426
    %v1438 = vadd.f32 %v1333, %v1429
    %v1439 = vadd.f32 %v1334, %v1432
    %v1440 = vadd.f32 %v1335, %v1435
    %v1441 = vld [vmem:[%s9] sm:$0x1]
    %v1442 = vld [vmem:[%s10] sm:$0x1]
    %v1443 = vsel %vm79, %v1437, 0.0
    %1444 = vadd.xlane.f32.xlu0 %v1443
    %v1445 = vpop.xlane.xlu0 %1444
    %v1446 = vsel %vm79, %v1438, 0.0
    %1447 = vadd.xlane.f32.xlu0 %v1446
    %v1448 = vpop.xlane.xlu0 %1447
    %v1449 = vsel %vm79, %v1439, 0.0
    %1450 = vadd.xlane.f32.xlu0 %v1449
    %v1451 = vpop.xlane.xlu0 %1450
    %v1452 = vsel %vm1235, %v1440, 0.0
    %1453 = vadd.xlane.f32.xlu0 %v1452
    %v1454 = vpop.xlane.xlu0 %1453
    %v1455 = vmul.f32 %v1445, %v1245
    %v1456 = vmul.f32 %v1448, %v1245
    %v1457 = vmul.f32 %v1451, %v1245
    %v1458 = vmul.f32 %v1454, %v1245
    %v1459 = vsub.f32 %v1437, %v1455
    %v1460 = vsub.f32 %v1438, %v1456
    %v1461 = vsub.f32 %v1439, %v1457
    %v1462 = vsub.f32 %v1440, %v1458
    %v1463 = vmul.f32 %v1459, %v1459
    %v1464 = vmul.f32 %v1460, %v1460
    %v1465 = vmul.f32 %v1461, %v1461
    %v1466 = vmul.f32 %v1462, %v1462
    %v1467 = vsel %vm79, %v1463, 0.0
    %1468 = vadd.xlane.f32.xlu0 %v1467
    %v1469 = vpop.xlane.xlu0 %1468
    %v1470 = vsel %vm79, %v1464, 0.0
    %1471 = vadd.xlane.f32.xlu0 %v1470
    %v1472 = vpop.xlane.xlu0 %1471
    %v1473 = vsel %vm79, %v1465, 0.0
    %1474 = vadd.xlane.f32.xlu0 %v1473
    %v1475 = vpop.xlane.xlu0 %1474
    %v1476 = vsel %vm1235, %v1466, 0.0
    %1477 = vadd.xlane.f32.xlu0 %v1476
    %v1478 = vpop.xlane.xlu0 %1477
    %v1479 = vmul.f32 %v1469, %v1245
    %v1480 = vmul.f32 %v1472, %v1245
    %v1481 = vmul.f32 %v1475, %v1245
    %v1482 = vmul.f32 %v1478, %v1245
    %v1483 = vadd.f32 %v1479, 1e-05
    %v1484 = vadd.f32 %v1480, 1e-05
    %v1485 = vadd.f32 %v1481, 1e-05
    %v1486 = vadd.f32 %v1482, 1e-05
    %v1487 = vrsqrt.pop %v1483
    %v1488 = vmul.f32 %v1487, %v1483
    %v1489 = vmul.f32 %v1488, %v1487
    %v1490 = vmul.f32 0.5, %v1489
    %v1491 = vsub.f32 1.5, %v1490
    %v1492 = vmul.f32 %v1487, %v1491
    %vm1493 = vweird.f32 %v1483
    %vm1494 = vweird.f32 %v1487
    %vm1495 = vmor %vm1493, %vm1494
    %v1496 = vsel %vm1495, %v1487, %v1492
    %v1497 = vrsqrt.pop %v1484
    %v1498 = vmul.f32 %v1497, %v1484
    %v1499 = vmul.f32 %v1498, %v1497
    %v1500 = vmul.f32 0.5, %v1499
    %v1501 = vsub.f32 1.5, %v1500
    %v1502 = vmul.f32 %v1497, %v1501
    %vm1503 = vweird.f32 %v1484
    %vm1504 = vweird.f32 %v1497
    %vm1505 = vmor %vm1503, %vm1504
    %v1506 = vsel %vm1505, %v1497, %v1502
    %v1507 = vrsqrt.pop %v1485
    %v1508 = vmul.f32 %v1507, %v1485
    %v1509 = vmul.f32 %v1508, %v1507
    %v1510 = vmul.f32 0.5, %v1509
    %v1511 = vsub.f32 1.5, %v1510
    %v1512 = vmul.f32 %v1507, %v1511
    %vm1513 = vweird.f32 %v1485
    %vm1514 = vweird.f32 %v1507
    %vm1515 = vmor %vm1513, %vm1514
    %v1516 = vsel %vm1515, %v1507, %v1512
    %v1517 = vrsqrt.pop %v1486
    %v1518 = vmul.f32 %v1517, %v1486
    %v1519 = vmul.f32 %v1518, %v1517
    %v1520 = vmul.f32 0.5, %v1519
    %v1521 = vsub.f32 1.5, %v1520
    %v1522 = vmul.f32 %v1517, %v1521
    %vm1523 = vweird.f32 %v1486
    %vm1524 = vweird.f32 %v1517
    %vm1525 = vmor %vm1523, %vm1524
    %v1526 = vsel %vm1525, %v1517, %v1522
    %v1527 = vmul.f32 %v1459, %v1496
    %v1528 = vmul.f32 %v1460, %v1506
    %v1529 = vmul.f32 %v1461, %v1516
    %v1530 = vmul.f32 %v1462, %v1526
    %v1532 = vperm.slane %v1441, 0
    %v1534 = vmul.f32 %v1527, %v1532
    %v1535 = vmul.f32 %v1528, %v1532
    %v1536 = vmul.f32 %v1529, %v1532
    %v1537 = vmul.f32 %v1530, %v1532
    %v1539 = vperm.slane %v1442, 0
    %v1541 = vadd.f32 %v1534, %v1539
    %v1542 = vadd.f32 %v1535, %v1539
    %v1543 = vadd.f32 %v1536, %v1539
    %v1544 = vadd.f32 %v1537, %v1539
    %v1545 = vsel %vm304, %v1541, -inf
    %v1546 = vrot.slane %v1545, 4
    %v1547 = vmax.f32 %v1545, %v1546
    %v1548 = vrot.slane %v1547, 2
    %v1549 = vmax.f32 %v1547, %v1548
    %v1550 = vrot.slane %v1549, 1
    %v1551 = vmax.f32 %v1549, %v1550
    %vm1552 = vcmask 122880
    %1553 = vst.msk [vmem:[#allocation3] sm:$0x1] %vm1552, %v1551
    %vm1554 = vcmask 130053
    %v1555 = vsel %vm1554, %v1541, -inf
    %vm1556 = vcmask 123904
    %v1557 = vsel %vm1556, %v1542, -inf
    %v1558 = vmax.f32 %v1555, %v1557
    %v1559 = vrot.slane %v1558, 4
    %v1560 = vmax.f32 %v1558, %v1559
    %v1561 = vrot.slane %v1560, 2
    %v1562 = vmax.f32 %v1560, %v1561
    %v1563 = vrot.slane %v1562, 1
    %v1564 = vmax.f32 %v1562, %v1563
    %1565 = vst.msk [vmem:[#allocation3 + $0x1] sm:$0x1] %vm1552, %v1564
    %vm1566 = vcmask 129026
    %v1567 = vsel %vm1566, %v1542, -inf
    %v1568 = vrot.slane %v1567, 4
    %v1569 = vmax.f32 %v1567, %v1568
    %v1570 = vrot.slane %v1569, 2
    %v1571 = vmax.f32 %v1569, %v1570
    %v1572 = vrot.slane %v1571, 1
    %v1573 = vmax.f32 %v1571, %v1572
    %1574 = vst.msk [vmem:[#allocation3 + $0x2] sm:$0x1] %vm1552, %v1573
    %vm1575 = vcmask 130055
    %v1576 = vsel %vm1575, %v1542, -inf
    %vm1577 = vcmask 125952
    %v1578 = vsel %vm1577, %v1543, -inf
    %v1579 = vmax.f32 %v1576, %v1578
    %v1580 = vrot.slane %v1579, 4
    %v1581 = vmax.f32 %v1579, %v1580
    %v1582 = vrot.slane %v1581, 2
    %v1583 = vmax.f32 %v1581, %v1582
    %v1584 = vrot.slane %v1583, 1
    %v1585 = vmax.f32 %v1583, %v1584
    %1586 = vst.msk [vmem:[#allocation3 + $0x3] sm:$0x1] %vm1552, %v1585
    %vm1587 = vcmask 130052
    %v1588 = vsel %vm1587, %v1543, -inf
    %v1589 = vsel %vm1552, %v1544, -inf
    %v1590 = vmax.f32 %v1588, %v1589
    %v1591 = vrot.slane %v1590, 4
    %v1592 = vmax.f32 %v1590, %v1591
    %v1593 = vrot.slane %v1592, 2
    %v1594 = vmax.f32 %v1592, %v1593
    %v1595 = vrot.slane %v1594, 1
    %v1596 = vmax.f32 %v1594, %v1595
    %1597 = vst.msk [vmem:[#allocation3 + $0x4] sm:$0x1] %vm1552, %v1596
    %vm1598 = vcmask 128001
    %v1599 = vsel %vm1598, %v1544, -inf
    %v1600 = vrot.slane %v1599, 4
    %v1601 = vmax.f32 %v1599, %v1600
    %v1602 = vrot.slane %v1601, 2
    %v1603 = vmax.f32 %v1601, %v1602
    %v1604 = vrot.slane %v1603, 1
    %v1605 = vmax.f32 %v1603, %v1604
    %1606 = vst.msk [vmem:[#allocation3 + $0x5] sm:$0x1] %vm1552, %v1605
    %v1607 = vld [vmem:[#allocation3] sm:$0x3f]
    %v1608 = vld [vmem:[%s15] sm:$0xff]
    %v1609 = vld [vmem:[%s15 + $0x8] sm:$0xff]
    %v1610 = vld [vmem:[%s16] sm:$0x1]
    %v1612 = vperm.slane %v1610, 0
    %v1615 = vsel %vm79, %v1607, 0
    %1617 = vmatpush.msra.mxu0 0.0
    %1618 = vmatpush.msra.mxu0 0.0
    %1619 = vmatpush.msra.mxu0 0.0
    %1620 = vmatpush.msra.mxu0 0.0
    %1621 = vmatpush.msra.mxu0 0.0
    %1622 = vmatpush.msra.mxu0 0.0
    %1623 = vmatpush.msra.mxu0 0.0
    %1624 = vmatpush.msra.mxu0 0.0
    %1625 = vmatpush.msra.mxu0 0.0
    %1626 = vmatpush.msra.mxu0 0.0
    %1627 = vmatpush.msra.mxu0 0.0
    %1628 = vmatpush.msra.mxu0 0.0
    %1629 = vmatpush.msra.mxu0 0.0
    %1630 = vmatpush.msra.mxu0 0.0
    %1631 = vmatpush.msra.mxu0 %v1609
    %1632 = vmatpush.msra.mxu0 %v1608
    %1633 = vmatmul.f32.gmra.mxu0 %v1615
    %v1634 = vpop.f32.mrf.mxu0
    %v1635 = vadd.f32 %v1612, %v1634
    %1636 = vdwg.mxu0
    %v1637 = vmax.f32 %v1635, 0.0
    %v1638 = vld [vmem:[%s1] sm:$0x3f]
    %v1639 = vld [vmem:[%s17] sm:$0xff]
    %v1640 = vld [vmem:[%s17 + $0x8] sm:$0xff]
    %v1641 = vld [vmem:[%s17 + $0x10] sm:$0xff]
    %v1642 = vld [vmem:[%s17 + $0x18] sm:$0xff]
    %v1643 = vld [vmem:[%s17 + $0x20] sm:$0x3]
    %v1644 = vld [vmem:[%s18] sm:$0x1]
    %v1646 = vperm.slane %v1644, 0
    %vm1648 = vcmask 277504
    %v1650 = vsel %vm1648, %v1638, 0
    %vm1652 = vcmask 1041408
    %v1654 = vsel %vm1652, %v1643, 0
    %1656 = vmatpush.msra.mxu0 0.0
    %1657 = vmatpush.msra.mxu0 0.0
    %1658 = vmatpush.msra.mxu0 0.0
    %1659 = vmatpush.msra.mxu0 0.0
    %1660 = vmatpush.msra.mxu0 0.0
    %1661 = vmatpush.msra.mxu0 0.0
    %1662 = vmatpush.msra.mxu0 0.0
    %1663 = vmatpush.msra.mxu0 0.0
    %1664 = vmatpush.msra.mxu0 0.0
    %1665 = vmatpush.msra.mxu0 0.0
    %1666 = vmatpush.msra.mxu0 0.0
    %1667 = vmatpush.msra.mxu0 %v1654
    %1668 = vmatpush.msra.mxu0 %v1642
    %1669 = vmatpush.msra.mxu0 %v1641
    %1670 = vmatpush.msra.mxu0 %v1640
    %1671 = vmatpush.msra.mxu0 %v1639
    %1672 = vmatmul.f32.gmra.mxu0 %v1650
    %v1673 = vpop.f32.mrf.mxu0
    %v1674 = vadd.f32 %v1646, %v1673
    %1675 = vdwg.mxu0
    %v1676 = vmax.f32 %v1674, 0.0
    %v1677 = vld [vmem:[%s19] sm:$0xff]
    %v1678 = vld [vmem:[%s19 + $0x8] sm:$0xff]
    %v1679 = vld [vmem:[%s19 + $0x10] sm:$0xff]
    %v1680 = vld [vmem:[%s19 + $0x18] sm:$0xff]
    %v1681 = vld [vmem:[%s20] sm:$0x1]
    %v1683 = vperm.slane %v1681, 0
    %v1686 = vsel %vm1395, %v1676, 0
    %1688 = vmatpush.msra.mxu0 0.0
    %1689 = vmatpush.msra.mxu0 0.0
    %1690 = vmatpush.msra.mxu0 0.0
    %1691 = vmatpush.msra.mxu0 0.0
    %1692 = vmatpush.msra.mxu0 0.0
    %1693 = vmatpush.msra.mxu0 0.0
    %1694 = vmatpush.msra.mxu0 0.0
    %1695 = vmatpush.msra.mxu0 0.0
    %1696 = vmatpush.msra.mxu0 0.0
    %1697 = vmatpush.msra.mxu0 0.0
    %1698 = vmatpush.msra.mxu0 0.0
    %1699 = vmatpush.msra.mxu0 0.0
    %1700 = vmatpush.msra.mxu0 %v1680
    %1701 = vmatpush.msra.mxu0 %v1679
    %1702 = vmatpush.msra.mxu0 %v1678
    %1703 = vmatpush.msra.mxu0 %v1677
    %1704 = vmatmul.f32.gmra.mxu0 %v1686
    %v1705 = vpop.f32.mrf.mxu0
    %v1706 = vadd.f32 %v1683, %v1705
    %1707 = vdwg.mxu0
    %v1708 = vadd.f32 %v1637, %v1706
    %v1709 = vld [vmem:[%s2] sm:$0x3f]
    %1711 = vset.pattern.permute.xlu0 0
    %1712 = vperm.xlu0 %1711, %v1709
    %v1713 = vpop.permute.xlu0 %1712
    %v1715 = vmul.f32 %v1708, %v1713
    %vm1716 = vcmask 259072
    %1717 = vst.msk [vmem:[#allocation4] sm:$0x3f] %vm1716, %v1715
    // Predicated region
    $region86: #{tpu_custom_call.1} parent=1 // pred_check
      _
    $region87: #{tpu_custom_call.1} parent=1 // pred_check_branch
      %1719 = sbr.rel (0) target = $region89
    $region88: #{tpu_custom_call.1} parent=1 // pred_region
      %1721 = vsyncadd [#allocation5], 0
      %s1723 = sshll.u32 [#allocation4], 4
      %s1724 = int_to_ptr.vmem [resolvable:$true] %s1723
      %s1725 = sshll.u32 %s21, 4
      %s1726 = int_to_ptr.hbm [resolvable:$true] %s1725
      %1728 = dma.vmem_to_hbm [thread:$0]  %s1724, 128, %s1726, [#allocation5]
    $region89: #{tpu_custom_call.1} parent=1 // pred_fallthru
      _
    // Predicated region
    $region90: #{tpu_custom_call.1} parent=1 // pred_check
      _
    $region91: #{tpu_custom_call.1} parent=1 // pred_check_branch
      %1730 = sbr.rel (0) target = $region93
    $region92: #{tpu_custom_call.1} parent=1 // pred_region
      %1732 = dma.done [#allocation5], 128
    $region93: #{tpu_custom_call.1} parent=1 // pred_fallthru
      _
    %1733 = vsyncpa [#allocation5], 1

</llo_original>
